<compile_context>
chip_gen: v5e
topology: v5e:2x2
jax: 0.10.0
libtpu: 0.0.40
codegen_flags: <defaults>
</compile_context>

<pallas_src>
import jax
import jax.numpy as jnp
from jax import lax
from jax.experimental import pallas as pl
from jax.experimental.pallas import tpu as pltpu


def _lstm_mlp_kernel(x_ref, wih0_ref, whh0_ref, b0_ref,
                     wih1_ref, whh1_ref, b1_ref,
                     fc1w_ref, fc1b_ref, fcw_ref, fcb_ref,
                     out_ref, xproj_ref, seq_ref):
    """One grid program = forward pass of LSTMModule for one batch shard.

    x_ref    : (1, T, Bs, I)   time-major input shard
    wih*_ref : (in, 4H)  LSTM input weights, pre-transposed, 'g' cols x2
    whh*_ref : (H, 4H)   LSTM hidden weights, pre-transposed, 'g' cols x2
    b*_ref   : (1, 4H)   b_ih + b_hh, 'g' slice x2
    fc1w_ref : (H, H),   fc1b_ref : (1, H)
    fcw_ref  : (H, Opad), fcb_ref : (1, Opad)   (Opad multiple of 128)
    out_ref  : (1, T, Bs, Opad)
    xproj_ref: (T, Bs, 4H) scratch — hoisted per-layer input projections
    seq_ref  : (T, Bs, H)  scratch — current layer's hidden-state sequence
    """
    _, T, Bs, _ = x_ref.shape
    H = whh0_ref.shape[0]

    def project(flat_in, wih, b):
        # One batched matmul replaces T tiny per-step matmuls; bias folded in
        # here so the recurrence adds nothing extra.
        proj = jnp.dot(flat_in, wih, preferred_element_type=jnp.float32) + b
        xproj_ref[...] = proj.reshape(T, Bs, 4 * H)

    def run_recurrence(whh):
        def step(t, carry):
            h, c = carry
            # Single matmul + add on the serial critical path per timestep.
            gates = xproj_ref[t] + jnp.dot(
                h, whh, preferred_element_type=jnp.float32)        # (Bs, 4H)
            # One full-width sigmoid (EUP) instead of 4 per-gate passes; the
            # 'g' gate pre-activation was pre-scaled by 2 in the wrapper so
            # tanh(z) == 2*sigmoid(2z) - 1 is exact.
            s = jax.nn.sigmoid(gates)
            i = s[:, 0 * H:1 * H]
            f = s[:, 1 * H:2 * H]
            g = 2.0 * s[:, 2 * H:3 * H] - 1.0
            o = s[:, 3 * H:4 * H]
            c_new = f * c + i * g
            h_new = o * jnp.tanh(c_new)
            seq_ref[t] = h_new
            return h_new, c_new

        h0 = jnp.zeros((Bs, H), jnp.float32)
        c0 = jnp.zeros((Bs, H), jnp.float32)
        # T is small and static: fully unroll for scheduler visibility.
        lax.fori_loop(0, T, step, (h0, c0), unroll=True)

    # ---- LSTM layer 0 ----
    project(x_ref[0].reshape(T * Bs, -1), wih0_ref[...], b0_ref[...])
    run_recurrence(whh0_ref[...])

    # ---- LSTM layer 1 ----
    # The full read of seq_ref (layer-0 outputs) is consumed by the hoisted
    # projection and written to xproj_ref BEFORE the layer-1 recurrence starts
    # overwriting seq_ref, so reusing seq_ref for layer-1 outputs is safe.
    project(seq_ref[...].reshape(T * Bs, H), wih1_ref[...], b1_ref[...])
    run_recurrence(whh1_ref[...])

    # ---- MLP head: fc(relu(fc1(relu(lstm_out)))) ----
    feat = jnp.maximum(seq_ref[...].reshape(T * Bs, H), 0.0)
    h1 = jnp.dot(feat, fc1w_ref[...],
                 preferred_element_type=jnp.float32) + fc1b_ref[...]
    h1 = jnp.maximum(h1, 0.0)
    y = jnp.dot(h1, fcw_ref[...],
                preferred_element_type=jnp.float32) + fcb_ref[...]  # (T*Bs, Opad)
    out_ref[0] = y.reshape(T, Bs, -1)        # lane-dense store (Opad % 128 == 0)


def _default_num_programs(B):
    # v7x has 2 TensorCores per device: split the batch across them via a
    # "parallel" grid axis.  On single-TC chips (v5e/v6e) extra programs would
    # only serialize the latency-bound recurrence, so keep one program.
    try:
        kind = jax.devices()[0].device_kind.lower()
    except Exception:
        return 1
    if "v7" in kind and B % 2 == 0:
        return 2
    return 1


def lstm_module_forward(x, p, num_programs=None):
    """x: (B, T, I) batch-first, params p in PyTorch convention."""
    B, T, I = x.shape
    H = p["w_hh_l0"].shape[1]
    O = p["fc_w"].shape[0]
    Opad = ((O + 127) // 128) * 128
    f32 = jnp.float32

    NP = _default_num_programs(B) if num_programs is None else num_programs
    assert B % NP == 0
    Bs = B // NP

    # tanh-via-sigmoid: scale the 'g' gate (cols 2H:3H, PyTorch i,f,g,o order)
    # of W_ih, W_hh and the combined bias by 2.
    gate_scale = jnp.concatenate(
        [jnp.ones((2 * H,), f32), 2.0 * jnp.ones((H,), f32), jnp.ones((H,), f32)])

    def prep_layer(w_ih, w_hh, b_ih, b_hh):
        wih_t = w_ih.T.astype(f32) * gate_scale[None, :]         # (in, 4H)
        whh_t = w_hh.T.astype(f32) * gate_scale[None, :]         # (H, 4H)
        b = ((b_ih + b_hh).astype(f32) * gate_scale).reshape(1, 4 * H)
        return wih_t, whh_t, b

    wih0, whh0, b0 = prep_layer(p["w_ih_l0"], p["w_hh_l0"], p["b_ih_l0"], p["b_hh_l0"])
    wih1, whh1, b1 = prep_layer(p["w_ih_l1"], p["w_hh_l1"], p["b_ih_l1"], p["b_hh_l1"])

    fc1w = p["fc1_w"].T.astype(f32)                              # (H, H)
    fc1b = p["fc1_b"].astype(f32).reshape(1, H)
    # Lane-pad the final Linear so the kernel's output store is dense.
    fcw = jnp.zeros((H, Opad), f32).at[:, :O].set(p["fc_w"].T.astype(f32))
    fcb = jnp.zeros((1, Opad), f32).at[:, :O].set(p["fc_b"].astype(f32).reshape(1, O))

    # (B, T, I) -> (NP, T, Bs, I): per-program time-major shards.
    x_tm = jnp.transpose(x.astype(f32), (1, 0, 2))               # (T, B, I)
    x_sh = jnp.transpose(x_tm.reshape(T, NP, Bs, I), (1, 0, 2, 3))

    def full(shape):
        return pl.BlockSpec(shape, lambda pgm: (0,) * len(shape))

    out_sh = pl.pallas_call(
        _lstm_mlp_kernel,
        out_shape=jax.ShapeDtypeStruct((NP, T, Bs, Opad), f32),
        grid=(NP,),
        in_specs=[
            pl.BlockSpec((1, T, Bs, I), lambda pgm: (pgm, 0, 0, 0)),
            full((I, 4 * H)), full((H, 4 * H)), full((1, 4 * H)),
            full((H, 4 * H)), full((H, 4 * H)), full((1, 4 * H)),
            full((H, H)), full((1, H)),
            full((H, Opad)), full((1, Opad)),
        ],
        out_specs=pl.BlockSpec((1, T, Bs, Opad), lambda pgm: (pgm, 0, 0, 0)),
        scratch_shapes=[
            pltpu.VMEM((T, Bs, 4 * H), f32),   # hoisted input projections
            pltpu.VMEM((T, Bs, H), f32),       # layer hidden-state sequence
        ],
        compiler_params=pltpu.CompilerParams(
            dimension_semantics=("parallel",)),
    )(x_sh, wih0, whh0, b0, wih1, whh1, b1, fc1w, fc1b, fcw, fcb)

    # (NP, T, Bs, Opad) -> (B, T, O)
    out = jnp.transpose(out_sh, (0, 2, 1, 3)).reshape(B, T, Opad)
    return out[:, :, :O]


def reference_forward(x, p):
    """Pure-JAX reference matching torch.nn.LSTM / Linear semantics."""
    B, T, _ = x.shape

    def run_layer(inp, w_ih, w_hh, b_ih, b_hh):
        H = w_hh.shape[1]
        h = jnp.zeros((B, H), jnp.float32)
        c = jnp.zeros((B, H), jnp.float32)
        outs = []
        for t in range(T):
            gates = inp[:, t, :] @ w_ih.T + b_ih + h @ w_hh.T + b_hh
            i, f, g, o = jnp.split(gates, 4, axis=1)
            i, f, o = jax.nn.sigmoid(i), jax.nn.sigmoid(f), jax.nn.sigmoid(o)
            g = jnp.tanh(g)
            c = f * c + i * g
            h = o * jnp.tanh(c)
            outs.append(h)
        return jnp.stack(outs, axis=1)

    out = run_layer(x, p["w_ih_l0"], p["w_hh_l0"], p["b_ih_l0"], p["b_hh_l0"])
    out = run_layer(out, p["w_ih_l1"], p["w_hh_l1"], p["b_ih_l1"], p["b_hh_l1"])
    out = jnp.maximum(out, 0.0) @ p["fc1_w"].T + p["fc1_b"]
    out = jnp.maximum(out, 0.0)
    out = out @ p["fc_w"].T + p["fc_b"]
    return out


def init_params(key, input_size, hidden_size, output_size):
    k = 1.0 / jnp.sqrt(hidden_size)
    names_shapes = [
        ("w_ih_l0", (4 * hidden_size, input_size)),
        ("w_hh_l0", (4 * hidden_size, hidden_size)),
        ("b_ih_l0", (4 * hidden_size,)),
        ("b_hh_l0", (4 * hidden_size,)),
        ("w_ih_l1", (4 * hidden_size, hidden_size)),
        ("w_hh_l1", (4 * hidden_size, hidden_size)),
        ("b_ih_l1", (4 * hidden_size,)),
        ("b_hh_l1", (4 * hidden_size,)),
        ("fc1_w", (hidden_size, hidden_size)),
        ("fc1_b", (hidden_size,)),
        ("fc_w", (output_size, hidden_size)),
        ("fc_b", (output_size,)),
    ]
    keys = jax.random.split(key, len(names_shapes))
    return {
        name: jax.random.uniform(kk, shape, jnp.float32, minval=-k, maxval=k)
        for kk, (name, shape) in zip(keys, names_shapes)
    }


if __name__ == "__main__":
    # LSTMModule(input_size=16, hidden_size=32, num_layers=2, output_size=8)
    B, T, I, H, O = 4, 8, 16, 32, 8

    key = jax.random.PRNGKey(0)
    pkey, xkey = jax.random.split(key)
    params = init_params(pkey, I, H, O)
    x = jax.random.normal(xkey, (B, T, I), jnp.float32)

    out = jax.block_until_ready(lstm_module_forward(x, params))
    ref = jax.block_until_ready(reference_forward(x, params))

    assert out.shape == (B, T, O), out.shape
    err = jnp.max(jnp.abs(out - ref))
    assert jnp.allclose(out, ref, atol=1e-4, rtol=1e-4), f"max abs err {err}"
    print("KERNEL_OK")
</pallas_src>

<mosaic_0001>
module attributes {stable_mosaic.version = 11 : i64} {
  func.func @_lstm_mlp_kernel(%arg0: i32, %arg1: memref<1x8x4x16xf32, #tpu.memory_space<vmem>>, %arg2: memref<16x128xf32, #tpu.memory_space<vmem>>, %arg3: memref<32x128xf32, #tpu.memory_space<vmem>>, %arg4: memref<1x128xf32, #tpu.memory_space<vmem>>, %arg5: memref<32x128xf32, #tpu.memory_space<vmem>>, %arg6: memref<32x128xf32, #tpu.memory_space<vmem>>, %arg7: memref<1x128xf32, #tpu.memory_space<vmem>>, %arg8: memref<32x32xf32, #tpu.memory_space<vmem>>, %arg9: memref<1x32xf32, #tpu.memory_space<vmem>>, %arg10: memref<32x128xf32, #tpu.memory_space<vmem>>, %arg11: memref<1x128xf32, #tpu.memory_space<vmem>>, %arg12: memref<1x8x4x128xf32, #tpu.memory_space<vmem>>, %arg13: memref<8x4x128xf32, #tpu.memory_space<vmem>>, %arg14: memref<8x4x32xf32, #tpu.memory_space<vmem>>) attributes {dimension_semantics = [#tpu.dimension_semantics<parallel>], iteration_bounds = array<i64: 1>, scalar_prefetch = 0 : i64, scratch_operands = 2 : i64, tpu.core_type = #tpu.core_type<tc>, window_params = [{transform_indices = @transform_0, window_bounds = array<i64: 1, 8, 4, 16>}, {pipeline_mode = #tpu.pipeline_mode<synchronous>, transform_indices = @transform_1, window_bounds = array<i64: 16, 128>}, {pipeline_mode = #tpu.pipeline_mode<synchronous>, transform_indices = @transform_2, window_bounds = array<i64: 32, 128>}, {pipeline_mode = #tpu.pipeline_mode<synchronous>, transform_indices = @transform_3, window_bounds = array<i64: 1, 128>}, {pipeline_mode = #tpu.pipeline_mode<synchronous>, transform_indices = @transform_4, window_bounds = array<i64: 32, 128>}, {pipeline_mode = #tpu.pipeline_mode<synchronous>, transform_indices = @transform_5, window_bounds = array<i64: 32, 128>}, {pipeline_mode = #tpu.pipeline_mode<synchronous>, transform_indices = @transform_6, window_bounds = array<i64: 1, 128>}, {pipeline_mode = #tpu.pipeline_mode<synchronous>, transform_indices = @transform_7, window_bounds = array<i64: 32, 32>}, {pipeline_mode = #tpu.pipeline_mode<synchronous>, transform_indices = @transform_8, window_bounds = array<i64: 1, 32>}, {pipeline_mode = #tpu.pipeline_mode<synchronous>, transform_indices = @transform_9, window_bounds = array<i64: 32, 128>}, {pipeline_mode = #tpu.pipeline_mode<synchronous>, transform_indices = @transform_10, window_bounds = array<i64: 1, 128>}, {transform_indices = @transform_11, window_bounds = array<i64: 1, 8, 4, 128>}]} {
    %c0 = arith.constant 0 : index
    %c0_0 = arith.constant 0 : index
    %c0_1 = arith.constant 0 : index
    %c0_2 = arith.constant 0 : index
    %0 = vector.load %arg1[%c0, %c0_0, %c0_1, %c0_2] : memref<1x8x4x16xf32, #tpu.memory_space<vmem>>, vector<1x8x4x16xf32>
    %1 = vector.shape_cast %0 : vector<1x8x4x16xf32> to vector<8x4x16xf32>
    %2 = vector.shape_cast %1 : vector<8x4x16xf32> to vector<32x16xf32>
    %c0_3 = arith.constant 0 : index
    %c0_4 = arith.constant 0 : index
    %3 = vector.load %arg2[%c0_3, %c0_4] : memref<16x128xf32, #tpu.memory_space<vmem>>, vector<16x128xf32>
    %c0_5 = arith.constant 0 : index
    %c0_6 = arith.constant 0 : index
    %4 = vector.load %arg4[%c0_5, %c0_6] : memref<1x128xf32, #tpu.memory_space<vmem>>, vector<1x128xf32>
    %cst = arith.constant dense<0.000000e+00> : vector<32x128xf32>
    %5 = tpu.matmul %2, %3, %cst {dimension_numbers = #tpu.dot_dimension_numbers<[1], [0], [0], [1], [0, 0, 1, 1], [], []>} : vector<32x16xf32>, vector<16x128xf32>, vector<32x128xf32> -> vector<32x128xf32>
    %6 = vector.broadcast %4 : vector<1x128xf32> to vector<32x128xf32>
    %7 = arith.addf %5, %6 : vector<32x128xf32>
    %8 = vector.shape_cast %7 : vector<32x128xf32> to vector<8x4x128xf32>
    %c0_7 = arith.constant 0 : index
    %c0_8 = arith.constant 0 : index
    %c0_9 = arith.constant 0 : index
    %9 = vector.load %arg13[%c0_7, %c0_8, %c0_9] : memref<8x4x128xf32, #tpu.memory_space<vmem>>, vector<8x4x128xf32>
    tpu.vector_store %arg13[%c0_7, %c0_8, %c0_9], %8 {strides = array<i32>} : memref<8x4x128xf32, #tpu.memory_space<vmem>>, vector<8x4x128xf32>,
    %c0_10 = arith.constant 0 : index
    %c0_11 = arith.constant 0 : index
    %10 = vector.load %arg3[%c0_10, %c0_11] : memref<32x128xf32, #tpu.memory_space<vmem>>, vector<32x128xf32>
    %cst_12 = arith.constant 0.000000e+00 : f32
    %11 = vector.broadcast %cst_12 : f32 to vector<4x32xf32>
    %cst_13 = arith.constant 0.000000e+00 : f32
    %12 = vector.broadcast %cst_13 : f32 to vector<4x32xf32>
    %c0_i32 = arith.constant 0 : i32
    %13 = arith.index_cast %c0_i32 : i32 to index
    %c0_14 = arith.constant 0 : index
    %c0_15 = arith.constant 0 : index
    %14 = vector.load %arg13[%13, %c0_14, %c0_15] : memref<8x4x128xf32, #tpu.memory_space<vmem>>, vector<1x4x128xf32>
    %15 = vector.shape_cast %14 : vector<1x4x128xf32> to vector<4x128xf32>
    %cst_16 = arith.constant dense<0.000000e+00> : vector<4x128xf32>
    %16 = tpu.matmul %11, %10, %cst_16 {dimension_numbers = #tpu.dot_dimension_numbers<[1], [0], [0], [1], [0, 0, 1, 1], [], []>} : vector<4x32xf32>, vector<32x128xf32>, vector<4x128xf32> -> vector<4x128xf32>
    %17 = arith.addf %15, %16 : vector<4x128xf32>
    %18 = arith.negf %17 : vector<4x128xf32>
    %19 = math.exp %18 : vector<4x128xf32>
    %cst_17 = arith.constant 1.000000e+00 : f32
    %20 = vector.broadcast %cst_17 : f32 to vector<4x128xf32>
    %21 = arith.addf %20, %19 : vector<4x128xf32>
    %22 = arith.divf %20, %21 : vector<4x128xf32>
    %23 = vector.extract_strided_slice %22 {offsets = [0, 0], sizes = [4, 32], strides = [1, 1]} : vector<4x128xf32> to vector<4x32xf32>
    %24 = vector.extract_strided_slice %22 {offsets = [0, 32], sizes = [4, 32], strides = [1, 1]} : vector<4x128xf32> to vector<4x32xf32>
    %25 = vector.extract_strided_slice %22 {offsets = [0, 64], sizes = [4, 32], strides = [1, 1]} : vector<4x128xf32> to vector<4x32xf32>
    %cst_18 = arith.constant 2.000000e+00 : f32
    %26 = vector.broadcast %cst_18 : f32 to vector<4x32xf32>
    %27 = arith.mulf %26, %25 : vector<4x32xf32>
    %cst_19 = arith.constant 1.000000e+00 : f32
    %28 = vector.broadcast %cst_19 : f32 to vector<4x32xf32>
    %29 = arith.subf %27, %28 : vector<4x32xf32>
    %30 = vector.extract_strided_slice %22 {offsets = [0, 96], sizes = [4, 32], strides = [1, 1]} : vector<4x128xf32> to vector<4x32xf32>
    %31 = arith.mulf %24, %12 : vector<4x32xf32>
    %32 = arith.mulf %23, %29 : vector<4x32xf32>
    %33 = arith.addf %31, %32 : vector<4x32xf32>
    %34 = math.tanh %33 : vector<4x32xf32>
    %35 = arith.mulf %30, %34 : vector<4x32xf32>
    %36 = arith.index_cast %c0_i32 : i32 to index
    %c0_20 = arith.constant 0 : index
    %c0_21 = arith.constant 0 : index
    %37 = vector.load %arg14[%36, %c0_20, %c0_21] : memref<8x4x32xf32, #tpu.memory_space<vmem>>, vector<1x4x32xf32>
    %38 = vector.shape_cast %37 : vector<1x4x32xf32> to vector<4x32xf32>
    %39 = vector.shape_cast %35 : vector<4x32xf32> to vector<1x4x32xf32>
    tpu.vector_store %arg14[%36, %c0_20, %c0_21], %39 {strides = array<i32>} : memref<8x4x32xf32, #tpu.memory_space<vmem>>, vector<1x4x32xf32>,
    %c1_i32 = arith.constant 1 : i32
    %40 = arith.index_cast %c1_i32 : i32 to index
    %c0_22 = arith.constant 0 : index
    %c0_23 = arith.constant 0 : index
    %41 = vector.load %arg13[%40, %c0_22, %c0_23] : memref<8x4x128xf32, #tpu.memory_space<vmem>>, vector<1x4x128xf32>
    %42 = vector.shape_cast %41 : vector<1x4x128xf32> to vector<4x128xf32>
    %cst_24 = arith.constant dense<0.000000e+00> : vector<4x128xf32>
    %43 = tpu.matmul %35, %10, %cst_24 {dimension_numbers = #tpu.dot_dimension_numbers<[1], [0], [0], [1], [0, 0, 1, 1], [], []>} : vector<4x32xf32>, vector<32x128xf32>, vector<4x128xf32> -> vector<4x128xf32>
    %44 = arith.addf %42, %43 : vector<4x128xf32>
    %45 = arith.negf %44 : vector<4x128xf32>
    %46 = math.exp %45 : vector<4x128xf32>
    %cst_25 = arith.constant 1.000000e+00 : f32
    %47 = vector.broadcast %cst_25 : f32 to vector<4x128xf32>
    %48 = arith.addf %47, %46 : vector<4x128xf32>
    %49 = arith.divf %47, %48 : vector<4x128xf32>
    %50 = vector.extract_strided_slice %49 {offsets = [0, 0], sizes = [4, 32], strides = [1, 1]} : vector<4x128xf32> to vector<4x32xf32>
    %51 = vector.extract_strided_slice %49 {offsets = [0, 32], sizes = [4, 32], strides = [1, 1]} : vector<4x128xf32> to vector<4x32xf32>
    %52 = vector.extract_strided_slice %49 {offsets = [0, 64], sizes = [4, 32], strides = [1, 1]} : vector<4x128xf32> to vector<4x32xf32>
    %cst_26 = arith.constant 2.000000e+00 : f32
    %53 = vector.broadcast %cst_26 : f32 to vector<4x32xf32>
    %54 = arith.mulf %53, %52 : vector<4x32xf32>
    %cst_27 = arith.constant 1.000000e+00 : f32
    %55 = vector.broadcast %cst_27 : f32 to vector<4x32xf32>
    %56 = arith.subf %54, %55 : vector<4x32xf32>
    %57 = vector.extract_strided_slice %49 {offsets = [0, 96], sizes = [4, 32], strides = [1, 1]} : vector<4x128xf32> to vector<4x32xf32>
    %58 = arith.mulf %51, %33 : vector<4x32xf32>
    %59 = arith.mulf %50, %56 : vector<4x32xf32>
    %60 = arith.addf %58, %59 : vector<4x32xf32>
    %61 = math.tanh %60 : vector<4x32xf32>
    %62 = arith.mulf %57, %61 : vector<4x32xf32>
    %63 = arith.index_cast %c1_i32 : i32 to index
    %c0_28 = arith.constant 0 : index
    %c0_29 = arith.constant 0 : index
    %64 = vector.load %arg14[%63, %c0_28, %c0_29] : memref<8x4x32xf32, #tpu.memory_space<vmem>>, vector<1x4x32xf32>
    %65 = vector.shape_cast %64 : vector<1x4x32xf32> to vector<4x32xf32>
    %66 = vector.shape_cast %62 : vector<4x32xf32> to vector<1x4x32xf32>
    tpu.vector_store %arg14[%63, %c0_28, %c0_29], %66 {strides = array<i32>} : memref<8x4x32xf32, #tpu.memory_space<vmem>>, vector<1x4x32xf32>,
    %c2_i32 = arith.constant 2 : i32
    %67 = arith.index_cast %c2_i32 : i32 to index
    %c0_30 = arith.constant 0 : index
    %c0_31 = arith.constant 0 : index
    %68 = vector.load %arg13[%67, %c0_30, %c0_31] : memref<8x4x128xf32, #tpu.memory_space<vmem>>, vector<1x4x128xf32>
    %69 = vector.shape_cast %68 : vector<1x4x128xf32> to vector<4x128xf32>
    %cst_32 = arith.constant dense<0.000000e+00> : vector<4x128xf32>
    %70 = tpu.matmul %62, %10, %cst_32 {dimension_numbers = #tpu.dot_dimension_numbers<[1], [0], [0], [1], [0, 0, 1, 1], [], []>} : vector<4x32xf32>, vector<32x128xf32>, vector<4x128xf32> -> vector<4x128xf32>
    %71 = arith.addf %69, %70 : vector<4x128xf32>
    %72 = arith.negf %71 : vector<4x128xf32>
    %73 = math.exp %72 : vector<4x128xf32>
    %cst_33 = arith.constant 1.000000e+00 : f32
    %74 = vector.broadcast %cst_33 : f32 to vector<4x128xf32>
    %75 = arith.addf %74, %73 : vector<4x128xf32>
    %76 = arith.divf %74, %75 : vector<4x128xf32>
    %77 = vector.extract_strided_slice %76 {offsets = [0, 0], sizes = [4, 32], strides = [1, 1]} : vector<4x128xf32> to vector<4x32xf32>
    %78 = vector.extract_strided_slice %76 {offsets = [0, 32], sizes = [4, 32], strides = [1, 1]} : vector<4x128xf32> to vector<4x32xf32>
    %79 = vector.extract_strided_slice %76 {offsets = [0, 64], sizes = [4, 32], strides = [1, 1]} : vector<4x128xf32> to vector<4x32xf32>
    %cst_34 = arith.constant 2.000000e+00 : f32
    %80 = vector.broadcast %cst_34 : f32 to vector<4x32xf32>
    %81 = arith.mulf %80, %79 : vector<4x32xf32>
    %cst_35 = arith.constant 1.000000e+00 : f32
    %82 = vector.broadcast %cst_35 : f32 to vector<4x32xf32>
    %83 = arith.subf %81, %82 : vector<4x32xf32>
    %84 = vector.extract_strided_slice %76 {offsets = [0, 96], sizes = [4, 32], strides = [1, 1]} : vector<4x128xf32> to vector<4x32xf32>
    %85 = arith.mulf %78, %60 : vector<4x32xf32>
    %86 = arith.mulf %77, %83 : vector<4x32xf32>
    %87 = arith.addf %85, %86 : vector<4x32xf32>
    %88 = math.tanh %87 : vector<4x32xf32>
    %89 = arith.mulf %84, %88 : vector<4x32xf32>
    %90 = arith.index_cast %c2_i32 : i32 to index
    %c0_36 = arith.constant 0 : index
    %c0_37 = arith.constant 0 : index
    %91 = vector.load %arg14[%90, %c0_36, %c0_37] : memref<8x4x32xf32, #tpu.memory_space<vmem>>, vector<1x4x32xf32>
    %92 = vector.shape_cast %91 : vector<1x4x32xf32> to vector<4x32xf32>
    %93 = vector.shape_cast %89 : vector<4x32xf32> to vector<1x4x32xf32>
    tpu.vector_store %arg14[%90, %c0_36, %c0_37], %93 {strides = array<i32>} : memref<8x4x32xf32, #tpu.memory_space<vmem>>, vector<1x4x32xf32>,
    %c3_i32 = arith.constant 3 : i32
    %94 = arith.index_cast %c3_i32 : i32 to index
    %c0_38 = arith.constant 0 : index
    %c0_39 = arith.constant 0 : index
    %95 = vector.load %arg13[%94, %c0_38, %c0_39] : memref<8x4x128xf32, #tpu.memory_space<vmem>>, vector<1x4x128xf32>
    %96 = vector.shape_cast %95 : vector<1x4x128xf32> to vector<4x128xf32>
    %cst_40 = arith.constant dense<0.000000e+00> : vector<4x128xf32>
    %97 = tpu.matmul %89, %10, %cst_40 {dimension_numbers = #tpu.dot_dimension_numbers<[1], [0], [0], [1], [0, 0, 1, 1], [], []>} : vector<4x32xf32>, vector<32x128xf32>, vector<4x128xf32> -> vector<4x128xf32>
    %98 = arith.addf %96, %97 : vector<4x128xf32>
    %99 = arith.negf %98 : vector<4x128xf32>
    %100 = math.exp %99 : vector<4x128xf32>
    %cst_41 = arith.constant 1.000000e+00 : f32
    %101 = vector.broadcast %cst_41 : f32 to vector<4x128xf32>
    %102 = arith.addf %101, %100 : vector<4x128xf32>
    %103 = arith.divf %101, %102 : vector<4x128xf32>
    %104 = vector.extract_strided_slice %103 {offsets = [0, 0], sizes = [4, 32], strides = [1, 1]} : vector<4x128xf32> to vector<4x32xf32>
    %105 = vector.extract_strided_slice %103 {offsets = [0, 32], sizes = [4, 32], strides = [1, 1]} : vector<4x128xf32> to vector<4x32xf32>
    %106 = vector.extract_strided_slice %103 {offsets = [0, 64], sizes = [4, 32], strides = [1, 1]} : vector<4x128xf32> to vector<4x32xf32>
    %cst_42 = arith.constant 2.000000e+00 : f32
    %107 = vector.broadcast %cst_42 : f32 to vector<4x32xf32>
    %108 = arith.mulf %107, %106 : vector<4x32xf32>
    %cst_43 = arith.constant 1.000000e+00 : f32
    %109 = vector.broadcast %cst_43 : f32 to vector<4x32xf32>
    %110 = arith.subf %108, %109 : vector<4x32xf32>
    %111 = vector.extract_strided_slice %103 {offsets = [0, 96], sizes = [4, 32], strides = [1, 1]} : vector<4x128xf32> to vector<4x32xf32>
    %112 = arith.mulf %105, %87 : vector<4x32xf32>
    %113 = arith.mulf %104, %110 : vector<4x32xf32>
    %114 = arith.addf %112, %113 : vector<4x32xf32>
    %115 = math.tanh %114 : vector<4x32xf32>
    %116 = arith.mulf %111, %115 : vector<4x32xf32>
    %117 = arith.index_cast %c3_i32 : i32 to index
    %c0_44 = arith.constant 0 : index
    %c0_45 = arith.constant 0 : index
    %118 = vector.load %arg14[%117, %c0_44, %c0_45] : memref<8x4x32xf32, #tpu.memory_space<vmem>>, vector<1x4x32xf32>
    %119 = vector.shape_cast %118 : vector<1x4x32xf32> to vector<4x32xf32>
    %120 = vector.shape_cast %116 : vector<4x32xf32> to vector<1x4x32xf32>
    tpu.vector_store %arg14[%117, %c0_44, %c0_45], %120 {strides = array<i32>} : memref<8x4x32xf32, #tpu.memory_space<vmem>>, vector<1x4x32xf32>,
    %c4_i32 = arith.constant 4 : i32
    %121 = arith.index_cast %c4_i32 : i32 to index
    %c0_46 = arith.constant 0 : index
    %c0_47 = arith.constant 0 : index
    %122 = vector.load %arg13[%121, %c0_46, %c0_47] : memref<8x4x128xf32, #tpu.memory_space<vmem>>, vector<1x4x128xf32>
    %123 = vector.shape_cast %122 : vector<1x4x128xf32> to vector<4x128xf32>
    %cst_48 = arith.constant dense<0.000000e+00> : vector<4x128xf32>
    %124 = tpu.matmul %116, %10, %cst_48 {dimension_numbers = #tpu.dot_dimension_numbers<[1], [0], [0], [1], [0, 0, 1, 1], [], []>} : vector<4x32xf32>, vector<32x128xf32>, vector<4x128xf32> -> vector<4x128xf32>
    %125 = arith.addf %123, %124 : vector<4x128xf32>
    %126 = arith.negf %125 : vector<4x128xf32>
    %127 = math.exp %126 : vector<4x128xf32>
    %cst_49 = arith.constant 1.000000e+00 : f32
    %128 = vector.broadcast %cst_49 : f32 to vector<4x128xf32>
    %129 = arith.addf %128, %127 : vector<4x128xf32>
    %130 = arith.divf %128, %129 : vector<4x128xf32>
    %131 = vector.extract_strided_slice %130 {offsets = [0, 0], sizes = [4, 32], strides = [1, 1]} : vector<4x128xf32> to vector<4x32xf32>
    %132 = vector.extract_strided_slice %130 {offsets = [0, 32], sizes = [4, 32], strides = [1, 1]} : vector<4x128xf32> to vector<4x32xf32>
    %133 = vector.extract_strided_slice %130 {offsets = [0, 64], sizes = [4, 32], strides = [1, 1]} : vector<4x128xf32> to vector<4x32xf32>
    %cst_50 = arith.constant 2.000000e+00 : f32
    %134 = vector.broadcast %cst_50 : f32 to vector<4x32xf32>
    %135 = arith.mulf %134, %133 : vector<4x32xf32>
    %cst_51 = arith.constant 1.000000e+00 : f32
    %136 = vector.broadcast %cst_51 : f32 to vector<4x32xf32>
    %137 = arith.subf %135, %136 : vector<4x32xf32>
    %138 = vector.extract_strided_slice %130 {offsets = [0, 96], sizes = [4, 32], strides = [1, 1]} : vector<4x128xf32> to vector<4x32xf32>
    %139 = arith.mulf %132, %114 : vector<4x32xf32>
    %140 = arith.mulf %131, %137 : vector<4x32xf32>
    %141 = arith.addf %139, %140 : vector<4x32xf32>
    %142 = math.tanh %141 : vector<4x32xf32>
    %143 = arith.mulf %138, %142 : vector<4x32xf32>
    %144 = arith.index_cast %c4_i32 : i32 to index
    %c0_52 = arith.constant 0 : index
    %c0_53 = arith.constant 0 : index
    %145 = vector.load %arg14[%144, %c0_52, %c0_53] : memref<8x4x32xf32, #tpu.memory_space<vmem>>, vector<1x4x32xf32>
    %146 = vector.shape_cast %145 : vector<1x4x32xf32> to vector<4x32xf32>
    %147 = vector.shape_cast %143 : vector<4x32xf32> to vector<1x4x32xf32>
    tpu.vector_store %arg14[%144, %c0_52, %c0_53], %147 {strides = array<i32>} : memref<8x4x32xf32, #tpu.memory_space<vmem>>, vector<1x4x32xf32>,
    %c5_i32 = arith.constant 5 : i32
    %148 = arith.index_cast %c5_i32 : i32 to index
    %c0_54 = arith.constant 0 : index
    %c0_55 = arith.constant 0 : index
    %149 = vector.load %arg13[%148, %c0_54, %c0_55] : memref<8x4x128xf32, #tpu.memory_space<vmem>>, vector<1x4x128xf32>
    %150 = vector.shape_cast %149 : vector<1x4x128xf32> to vector<4x128xf32>
    %cst_56 = arith.constant dense<0.000000e+00> : vector<4x128xf32>
    %151 = tpu.matmul %143, %10, %cst_56 {dimension_numbers = #tpu.dot_dimension_numbers<[1], [0], [0], [1], [0, 0, 1, 1], [], []>} : vector<4x32xf32>, vector<32x128xf32>, vector<4x128xf32> -> vector<4x128xf32>
    %152 = arith.addf %150, %151 : vector<4x128xf32>
    %153 = arith.negf %152 : vector<4x128xf32>
    %154 = math.exp %153 : vector<4x128xf32>
    %cst_57 = arith.constant 1.000000e+00 : f32
    %155 = vector.broadcast %cst_57 : f32 to vector<4x128xf32>
    %156 = arith.addf %155, %154 : vector<4x128xf32>
    %157 = arith.divf %155, %156 : vector<4x128xf32>
    %158 = vector.extract_strided_slice %157 {offsets = [0, 0], sizes = [4, 32], strides = [1, 1]} : vector<4x128xf32> to vector<4x32xf32>
    %159 = vector.extract_strided_slice %157 {offsets = [0, 32], sizes = [4, 32], strides = [1, 1]} : vector<4x128xf32> to vector<4x32xf32>
    %160 = vector.extract_strided_slice %157 {offsets = [0, 64], sizes = [4, 32], strides = [1, 1]} : vector<4x128xf32> to vector<4x32xf32>
    %cst_58 = arith.constant 2.000000e+00 : f32
    %161 = vector.broadcast %cst_58 : f32 to vector<4x32xf32>
    %162 = arith.mulf %161, %160 : vector<4x32xf32>
    %cst_59 = arith.constant 1.000000e+00 : f32
    %163 = vector.broadcast %cst_59 : f32 to vector<4x32xf32>
    %164 = arith.subf %162, %163 : vector<4x32xf32>
    %165 = vector.extract_strided_slice %157 {offsets = [0, 96], sizes = [4, 32], strides = [1, 1]} : vector<4x128xf32> to vector<4x32xf32>
    %166 = arith.mulf %159, %141 : vector<4x32xf32>
    %167 = arith.mulf %158, %164 : vector<4x32xf32>
    %168 = arith.addf %166, %167 : vector<4x32xf32>
    %169 = math.tanh %168 : vector<4x32xf32>
    %170 = arith.mulf %165, %169 : vector<4x32xf32>
    %171 = arith.index_cast %c5_i32 : i32 to index
    %c0_60 = arith.constant 0 : index
    %c0_61 = arith.constant 0 : index
    %172 = vector.load %arg14[%171, %c0_60, %c0_61] : memref<8x4x32xf32, #tpu.memory_space<vmem>>, vector<1x4x32xf32>
    %173 = vector.shape_cast %172 : vector<1x4x32xf32> to vector<4x32xf32>
    %174 = vector.shape_cast %170 : vector<4x32xf32> to vector<1x4x32xf32>
    tpu.vector_store %arg14[%171, %c0_60, %c0_61], %174 {strides = array<i32>} : memref<8x4x32xf32, #tpu.memory_space<vmem>>, vector<1x4x32xf32>,
    %c6_i32 = arith.constant 6 : i32
    %175 = arith.index_cast %c6_i32 : i32 to index
    %c0_62 = arith.constant 0 : index
    %c0_63 = arith.constant 0 : index
    %176 = vector.load %arg13[%175, %c0_62, %c0_63] : memref<8x4x128xf32, #tpu.memory_space<vmem>>, vector<1x4x128xf32>
    %177 = vector.shape_cast %176 : vector<1x4x128xf32> to vector<4x128xf32>
    %cst_64 = arith.constant dense<0.000000e+00> : vector<4x128xf32>
    %178 = tpu.matmul %170, %10, %cst_64 {dimension_numbers = #tpu.dot_dimension_numbers<[1], [0], [0], [1], [0, 0, 1, 1], [], []>} : vector<4x32xf32>, vector<32x128xf32>, vector<4x128xf32> -> vector<4x128xf32>
    %179 = arith.addf %177, %178 : vector<4x128xf32>
    %180 = arith.negf %179 : vector<4x128xf32>
    %181 = math.exp %180 : vector<4x128xf32>
    %cst_65 = arith.constant 1.000000e+00 : f32
    %182 = vector.broadcast %cst_65 : f32 to vector<4x128xf32>
    %183 = arith.addf %182, %181 : vector<4x128xf32>
    %184 = arith.divf %182, %183 : vector<4x128xf32>
    %185 = vector.extract_strided_slice %184 {offsets = [0, 0], sizes = [4, 32], strides = [1, 1]} : vector<4x128xf32> to vector<4x32xf32>
    %186 = vector.extract_strided_slice %184 {offsets = [0, 32], sizes = [4, 32], strides = [1, 1]} : vector<4x128xf32> to vector<4x32xf32>
    %187 = vector.extract_strided_slice %184 {offsets = [0, 64], sizes = [4, 32], strides = [1, 1]} : vector<4x128xf32> to vector<4x32xf32>
    %cst_66 = arith.constant 2.000000e+00 : f32
    %188 = vector.broadcast %cst_66 : f32 to vector<4x32xf32>
    %189 = arith.mulf %188, %187 : vector<4x32xf32>
    %cst_67 = arith.constant 1.000000e+00 : f32
    %190 = vector.broadcast %cst_67 : f32 to vector<4x32xf32>
    %191 = arith.subf %189, %190 : vector<4x32xf32>
    %192 = vector.extract_strided_slice %184 {offsets = [0, 96], sizes = [4, 32], strides = [1, 1]} : vector<4x128xf32> to vector<4x32xf32>
    %193 = arith.mulf %186, %168 : vector<4x32xf32>
    %194 = arith.mulf %185, %191 : vector<4x32xf32>
    %195 = arith.addf %193, %194 : vector<4x32xf32>
    %196 = math.tanh %195 : vector<4x32xf32>
    %197 = arith.mulf %192, %196 : vector<4x32xf32>
    %198 = arith.index_cast %c6_i32 : i32 to index
    %c0_68 = arith.constant 0 : index
    %c0_69 = arith.constant 0 : index
    %199 = vector.load %arg14[%198, %c0_68, %c0_69] : memref<8x4x32xf32, #tpu.memory_space<vmem>>, vector<1x4x32xf32>
    %200 = vector.shape_cast %199 : vector<1x4x32xf32> to vector<4x32xf32>
    %201 = vector.shape_cast %197 : vector<4x32xf32> to vector<1x4x32xf32>
    tpu.vector_store %arg14[%198, %c0_68, %c0_69], %201 {strides = array<i32>} : memref<8x4x32xf32, #tpu.memory_space<vmem>>, vector<1x4x32xf32>,
    %c7_i32 = arith.constant 7 : i32
    %202 = arith.index_cast %c7_i32 : i32 to index
    %c0_70 = arith.constant 0 : index
    %c0_71 = arith.constant 0 : index
    %203 = vector.load %arg13[%202, %c0_70, %c0_71] : memref<8x4x128xf32, #tpu.memory_space<vmem>>, vector<1x4x128xf32>
    %204 = vector.shape_cast %203 : vector<1x4x128xf32> to vector<4x128xf32>
    %cst_72 = arith.constant dense<0.000000e+00> : vector<4x128xf32>
    %205 = tpu.matmul %197, %10, %cst_72 {dimension_numbers = #tpu.dot_dimension_numbers<[1], [0], [0], [1], [0, 0, 1, 1], [], []>} : vector<4x32xf32>, vector<32x128xf32>, vector<4x128xf32> -> vector<4x128xf32>
    %206 = arith.addf %204, %205 : vector<4x128xf32>
    %207 = arith.negf %206 : vector<4x128xf32>
    %208 = math.exp %207 : vector<4x128xf32>
    %cst_73 = arith.constant 1.000000e+00 : f32
    %209 = vector.broadcast %cst_73 : f32 to vector<4x128xf32>
    %210 = arith.addf %209, %208 : vector<4x128xf32>
    %211 = arith.divf %209, %210 : vector<4x128xf32>
    %212 = vector.extract_strided_slice %211 {offsets = [0, 0], sizes = [4, 32], strides = [1, 1]} : vector<4x128xf32> to vector<4x32xf32>
    %213 = vector.extract_strided_slice %211 {offsets = [0, 32], sizes = [4, 32], strides = [1, 1]} : vector<4x128xf32> to vector<4x32xf32>
    %214 = vector.extract_strided_slice %211 {offsets = [0, 64], sizes = [4, 32], strides = [1, 1]} : vector<4x128xf32> to vector<4x32xf32>
    %cst_74 = arith.constant 2.000000e+00 : f32
    %215 = vector.broadcast %cst_74 : f32 to vector<4x32xf32>
    %216 = arith.mulf %215, %214 : vector<4x32xf32>
    %cst_75 = arith.constant 1.000000e+00 : f32
    %217 = vector.broadcast %cst_75 : f32 to vector<4x32xf32>
    %218 = arith.subf %216, %217 : vector<4x32xf32>
    %219 = vector.extract_strided_slice %211 {offsets = [0, 96], sizes = [4, 32], strides = [1, 1]} : vector<4x128xf32> to vector<4x32xf32>
    %220 = arith.mulf %213, %195 : vector<4x32xf32>
    %221 = arith.mulf %212, %218 : vector<4x32xf32>
    %222 = arith.addf %220, %221 : vector<4x32xf32>
    %223 = math.tanh %222 : vector<4x32xf32>
    %224 = arith.mulf %219, %223 : vector<4x32xf32>
    %225 = arith.index_cast %c7_i32 : i32 to index
    %c0_76 = arith.constant 0 : index
    %c0_77 = arith.constant 0 : index
    %226 = vector.load %arg14[%225, %c0_76, %c0_77] : memref<8x4x32xf32, #tpu.memory_space<vmem>>, vector<1x4x32xf32>
    %227 = vector.shape_cast %226 : vector<1x4x32xf32> to vector<4x32xf32>
    %228 = vector.shape_cast %224 : vector<4x32xf32> to vector<1x4x32xf32>
    tpu.vector_store %arg14[%225, %c0_76, %c0_77], %228 {strides = array<i32>} : memref<8x4x32xf32, #tpu.memory_space<vmem>>, vector<1x4x32xf32>,
    %c8_i32 = arith.constant 8 : i32
    %c0_78 = arith.constant 0 : index
    %c0_79 = arith.constant 0 : index
    %c0_80 = arith.constant 0 : index
    %229 = vector.load %arg14[%c0_78, %c0_79, %c0_80] : memref<8x4x32xf32, #tpu.memory_space<vmem>>, vector<8x4x32xf32>
    %230 = vector.shape_cast %229 : vector<8x4x32xf32> to vector<32x32xf32>
    %c0_81 = arith.constant 0 : index
    %c0_82 = arith.constant 0 : index
    %231 = vector.load %arg5[%c0_81, %c0_82] : memref<32x128xf32, #tpu.memory_space<vmem>>, vector<32x128xf32>
    %c0_83 = arith.constant 0 : index
    %c0_84 = arith.constant 0 : index
    %232 = vector.load %arg7[%c0_83, %c0_84] : memref<1x128xf32, #tpu.memory_space<vmem>>, vector<1x128xf32>
    %cst_85 = arith.constant dense<0.000000e+00> : vector<32x128xf32>
    %233 = tpu.matmul %230, %231, %cst_85 {dimension_numbers = #tpu.dot_dimension_numbers<[1], [0], [0], [1], [0, 0, 1, 1], [], []>} : vector<32x32xf32>, vector<32x128xf32>, vector<32x128xf32> -> vector<32x128xf32>
    %234 = vector.broadcast %232 : vector<1x128xf32> to vector<32x128xf32>
    %235 = arith.addf %233, %234 : vector<32x128xf32>
    %236 = vector.shape_cast %235 : vector<32x128xf32> to vector<8x4x128xf32>
    %c0_86 = arith.constant 0 : index
    %c0_87 = arith.constant 0 : index
    %c0_88 = arith.constant 0 : index
    %237 = vector.load %arg13[%c0_86, %c0_87, %c0_88] : memref<8x4x128xf32, #tpu.memory_space<vmem>>, vector<8x4x128xf32>
    tpu.vector_store %arg13[%c0_86, %c0_87, %c0_88], %236 {strides = array<i32>} : memref<8x4x128xf32, #tpu.memory_space<vmem>>, vector<8x4x128xf32>,
    %c0_89 = arith.constant 0 : index
    %c0_90 = arith.constant 0 : index
    %238 = vector.load %arg6[%c0_89, %c0_90] : memref<32x128xf32, #tpu.memory_space<vmem>>, vector<32x128xf32>
    %cst_91 = arith.constant 0.000000e+00 : f32
    %239 = vector.broadcast %cst_91 : f32 to vector<4x32xf32>
    %cst_92 = arith.constant 0.000000e+00 : f32
    %240 = vector.broadcast %cst_92 : f32 to vector<4x32xf32>
    %c0_i32_93 = arith.constant 0 : i32
    %241 = arith.index_cast %c0_i32_93 : i32 to index
    %c0_94 = arith.constant 0 : index
    %c0_95 = arith.constant 0 : index
    %242 = vector.load %arg13[%241, %c0_94, %c0_95] : memref<8x4x128xf32, #tpu.memory_space<vmem>>, vector<1x4x128xf32>
    %243 = vector.shape_cast %242 : vector<1x4x128xf32> to vector<4x128xf32>
    %cst_96 = arith.constant dense<0.000000e+00> : vector<4x128xf32>
    %244 = tpu.matmul %239, %238, %cst_96 {dimension_numbers = #tpu.dot_dimension_numbers<[1], [0], [0], [1], [0, 0, 1, 1], [], []>} : vector<4x32xf32>, vector<32x128xf32>, vector<4x128xf32> -> vector<4x128xf32>
    %245 = arith.addf %243, %244 : vector<4x128xf32>
    %246 = arith.negf %245 : vector<4x128xf32>
    %247 = math.exp %246 : vector<4x128xf32>
    %cst_97 = arith.constant 1.000000e+00 : f32
    %248 = vector.broadcast %cst_97 : f32 to vector<4x128xf32>
    %249 = arith.addf %248, %247 : vector<4x128xf32>
    %250 = arith.divf %248, %249 : vector<4x128xf32>
    %251 = vector.extract_strided_slice %250 {offsets = [0, 0], sizes = [4, 32], strides = [1, 1]} : vector<4x128xf32> to vector<4x32xf32>
    %252 = vector.extract_strided_slice %250 {offsets = [0, 32], sizes = [4, 32], strides = [1, 1]} : vector<4x128xf32> to vector<4x32xf32>
    %253 = vector.extract_strided_slice %250 {offsets = [0, 64], sizes = [4, 32], strides = [1, 1]} : vector<4x128xf32> to vector<4x32xf32>
    %cst_98 = arith.constant 2.000000e+00 : f32
    %254 = vector.broadcast %cst_98 : f32 to vector<4x32xf32>
    %255 = arith.mulf %254, %253 : vector<4x32xf32>
    %cst_99 = arith.constant 1.000000e+00 : f32
    %256 = vector.broadcast %cst_99 : f32 to vector<4x32xf32>
    %257 = arith.subf %255, %256 : vector<4x32xf32>
    %258 = vector.extract_strided_slice %250 {offsets = [0, 96], sizes = [4, 32], strides = [1, 1]} : vector<4x128xf32> to vector<4x32xf32>
    %259 = arith.mulf %252, %240 : vector<4x32xf32>
    %260 = arith.mulf %251, %257 : vector<4x32xf32>
    %261 = arith.addf %259, %260 : vector<4x32xf32>
    %262 = math.tanh %261 : vector<4x32xf32>
    %263 = arith.mulf %258, %262 : vector<4x32xf32>
    %264 = arith.index_cast %c0_i32_93 : i32 to index
    %c0_100 = arith.constant 0 : index
    %c0_101 = arith.constant 0 : index
    %265 = vector.load %arg14[%264, %c0_100, %c0_101] : memref<8x4x32xf32, #tpu.memory_space<vmem>>, vector<1x4x32xf32>
    %266 = vector.shape_cast %265 : vector<1x4x32xf32> to vector<4x32xf32>
    %267 = vector.shape_cast %263 : vector<4x32xf32> to vector<1x4x32xf32>
    tpu.vector_store %arg14[%264, %c0_100, %c0_101], %267 {strides = array<i32>} : memref<8x4x32xf32, #tpu.memory_space<vmem>>, vector<1x4x32xf32>,
    %c1_i32_102 = arith.constant 1 : i32
    %268 = arith.index_cast %c1_i32_102 : i32 to index
    %c0_103 = arith.constant 0 : index
    %c0_104 = arith.constant 0 : index
    %269 = vector.load %arg13[%268, %c0_103, %c0_104] : memref<8x4x128xf32, #tpu.memory_space<vmem>>, vector<1x4x128xf32>
    %270 = vector.shape_cast %269 : vector<1x4x128xf32> to vector<4x128xf32>
    %cst_105 = arith.constant dense<0.000000e+00> : vector<4x128xf32>
    %271 = tpu.matmul %263, %238, %cst_105 {dimension_numbers = #tpu.dot_dimension_numbers<[1], [0], [0], [1], [0, 0, 1, 1], [], []>} : vector<4x32xf32>, vector<32x128xf32>, vector<4x128xf32> -> vector<4x128xf32>
    %272 = arith.addf %270, %271 : vector<4x128xf32>
    %273 = arith.negf %272 : vector<4x128xf32>
    %274 = math.exp %273 : vector<4x128xf32>
    %cst_106 = arith.constant 1.000000e+00 : f32
    %275 = vector.broadcast %cst_106 : f32 to vector<4x128xf32>
    %276 = arith.addf %275, %274 : vector<4x128xf32>
    %277 = arith.divf %275, %276 : vector<4x128xf32>
    %278 = vector.extract_strided_slice %277 {offsets = [0, 0], sizes = [4, 32], strides = [1, 1]} : vector<4x128xf32> to vector<4x32xf32>
    %279 = vector.extract_strided_slice %277 {offsets = [0, 32], sizes = [4, 32], strides = [1, 1]} : vector<4x128xf32> to vector<4x32xf32>
    %280 = vector.extract_strided_slice %277 {offsets = [0, 64], sizes = [4, 32], strides = [1, 1]} : vector<4x128xf32> to vector<4x32xf32>
    %cst_107 = arith.constant 2.000000e+00 : f32
    %281 = vector.broadcast %cst_107 : f32 to vector<4x32xf32>
    %282 = arith.mulf %281, %280 : vector<4x32xf32>
    %cst_108 = arith.constant 1.000000e+00 : f32
    %283 = vector.broadcast %cst_108 : f32 to vector<4x32xf32>
    %284 = arith.subf %282, %283 : vector<4x32xf32>
    %285 = vector.extract_strided_slice %277 {offsets = [0, 96], sizes = [4, 32], strides = [1, 1]} : vector<4x128xf32> to vector<4x32xf32>
    %286 = arith.mulf %279, %261 : vector<4x32xf32>
    %287 = arith.mulf %278, %284 : vector<4x32xf32>
    %288 = arith.addf %286, %287 : vector<4x32xf32>
    %289 = math.tanh %288 : vector<4x32xf32>
    %290 = arith.mulf %285, %289 : vector<4x32xf32>
    %291 = arith.index_cast %c1_i32_102 : i32 to index
    %c0_109 = arith.constant 0 : index
    %c0_110 = arith.constant 0 : index
    %292 = vector.load %arg14[%291, %c0_109, %c0_110] : memref<8x4x32xf32, #tpu.memory_space<vmem>>, vector<1x4x32xf32>
    %293 = vector.shape_cast %292 : vector<1x4x32xf32> to vector<4x32xf32>
    %294 = vector.shape_cast %290 : vector<4x32xf32> to vector<1x4x32xf32>
    tpu.vector_store %arg14[%291, %c0_109, %c0_110], %294 {strides = array<i32>} : memref<8x4x32xf32, #tpu.memory_space<vmem>>, vector<1x4x32xf32>,
    %c2_i32_111 = arith.constant 2 : i32
    %295 = arith.index_cast %c2_i32_111 : i32 to index
    %c0_112 = arith.constant 0 : index
    %c0_113 = arith.constant 0 : index
    %296 = vector.load %arg13[%295, %c0_112, %c0_113] : memref<8x4x128xf32, #tpu.memory_space<vmem>>, vector<1x4x128xf32>
    %297 = vector.shape_cast %296 : vector<1x4x128xf32> to vector<4x128xf32>
    %cst_114 = arith.constant dense<0.000000e+00> : vector<4x128xf32>
    %298 = tpu.matmul %290, %238, %cst_114 {dimension_numbers = #tpu.dot_dimension_numbers<[1], [0], [0], [1], [0, 0, 1, 1], [], []>} : vector<4x32xf32>, vector<32x128xf32>, vector<4x128xf32> -> vector<4x128xf32>
    %299 = arith.addf %297, %298 : vector<4x128xf32>
    %300 = arith.negf %299 : vector<4x128xf32>
    %301 = math.exp %300 : vector<4x128xf32>
    %cst_115 = arith.constant 1.000000e+00 : f32
    %302 = vector.broadcast %cst_115 : f32 to vector<4x128xf32>
    %303 = arith.addf %302, %301 : vector<4x128xf32>
    %304 = arith.divf %302, %303 : vector<4x128xf32>
    %305 = vector.extract_strided_slice %304 {offsets = [0, 0], sizes = [4, 32], strides = [1, 1]} : vector<4x128xf32> to vector<4x32xf32>
    %306 = vector.extract_strided_slice %304 {offsets = [0, 32], sizes = [4, 32], strides = [1, 1]} : vector<4x128xf32> to vector<4x32xf32>
    %307 = vector.extract_strided_slice %304 {offsets = [0, 64], sizes = [4, 32], strides = [1, 1]} : vector<4x128xf32> to vector<4x32xf32>
    %cst_116 = arith.constant 2.000000e+00 : f32
    %308 = vector.broadcast %cst_116 : f32 to vector<4x32xf32>
    %309 = arith.mulf %308, %307 : vector<4x32xf32>
    %cst_117 = arith.constant 1.000000e+00 : f32
    %310 = vector.broadcast %cst_117 : f32 to vector<4x32xf32>
    %311 = arith.subf %309, %310 : vector<4x32xf32>
    %312 = vector.extract_strided_slice %304 {offsets = [0, 96], sizes = [4, 32], strides = [1, 1]} : vector<4x128xf32> to vector<4x32xf32>
    %313 = arith.mulf %306, %288 : vector<4x32xf32>
    %314 = arith.mulf %305, %311 : vector<4x32xf32>
    %315 = arith.addf %313, %314 : vector<4x32xf32>
    %316 = math.tanh %315 : vector<4x32xf32>
    %317 = arith.mulf %312, %316 : vector<4x32xf32>
    %318 = arith.index_cast %c2_i32_111 : i32 to index
    %c0_118 = arith.constant 0 : index
    %c0_119 = arith.constant 0 : index
    %319 = vector.load %arg14[%318, %c0_118, %c0_119] : memref<8x4x32xf32, #tpu.memory_space<vmem>>, vector<1x4x32xf32>
    %320 = vector.shape_cast %319 : vector<1x4x32xf32> to vector<4x32xf32>
    %321 = vector.shape_cast %317 : vector<4x32xf32> to vector<1x4x32xf32>
    tpu.vector_store %arg14[%318, %c0_118, %c0_119], %321 {strides = array<i32>} : memref<8x4x32xf32, #tpu.memory_space<vmem>>, vector<1x4x32xf32>,
    %c3_i32_120 = arith.constant 3 : i32
    %322 = arith.index_cast %c3_i32_120 : i32 to index
    %c0_121 = arith.constant 0 : index
    %c0_122 = arith.constant 0 : index
    %323 = vector.load %arg13[%322, %c0_121, %c0_122] : memref<8x4x128xf32, #tpu.memory_space<vmem>>, vector<1x4x128xf32>
    %324 = vector.shape_cast %323 : vector<1x4x128xf32> to vector<4x128xf32>
    %cst_123 = arith.constant dense<0.000000e+00> : vector<4x128xf32>
    %325 = tpu.matmul %317, %238, %cst_123 {dimension_numbers = #tpu.dot_dimension_numbers<[1], [0], [0], [1], [0, 0, 1, 1], [], []>} : vector<4x32xf32>, vector<32x128xf32>, vector<4x128xf32> -> vector<4x128xf32>
    %326 = arith.addf %324, %325 : vector<4x128xf32>
    %327 = arith.negf %326 : vector<4x128xf32>
    %328 = math.exp %327 : vector<4x128xf32>
    %cst_124 = arith.constant 1.000000e+00 : f32
    %329 = vector.broadcast %cst_124 : f32 to vector<4x128xf32>
    %330 = arith.addf %329, %328 : vector<4x128xf32>
    %331 = arith.divf %329, %330 : vector<4x128xf32>
    %332 = vector.extract_strided_slice %331 {offsets = [0, 0], sizes = [4, 32], strides = [1, 1]} : vector<4x128xf32> to vector<4x32xf32>
    %333 = vector.extract_strided_slice %331 {offsets = [0, 32], sizes = [4, 32], strides = [1, 1]} : vector<4x128xf32> to vector<4x32xf32>
    %334 = vector.extract_strided_slice %331 {offsets = [0, 64], sizes = [4, 32], strides = [1, 1]} : vector<4x128xf32> to vector<4x32xf32>
    %cst_125 = arith.constant 2.000000e+00 : f32
    %335 = vector.broadcast %cst_125 : f32 to vector<4x32xf32>
    %336 = arith.mulf %335, %334 : vector<4x32xf32>
    %cst_126 = arith.constant 1.000000e+00 : f32
    %337 = vector.broadcast %cst_126 : f32 to vector<4x32xf32>
    %338 = arith.subf %336, %337 : vector<4x32xf32>
    %339 = vector.extract_strided_slice %331 {offsets = [0, 96], sizes = [4, 32], strides = [1, 1]} : vector<4x128xf32> to vector<4x32xf32>
    %340 = arith.mulf %333, %315 : vector<4x32xf32>
    %341 = arith.mulf %332, %338 : vector<4x32xf32>
    %342 = arith.addf %340, %341 : vector<4x32xf32>
    %343 = math.tanh %342 : vector<4x32xf32>
    %344 = arith.mulf %339, %343 : vector<4x32xf32>
    %345 = arith.index_cast %c3_i32_120 : i32 to index
    %c0_127 = arith.constant 0 : index
    %c0_128 = arith.constant 0 : index
    %346 = vector.load %arg14[%345, %c0_127, %c0_128] : memref<8x4x32xf32, #tpu.memory_space<vmem>>, vector<1x4x32xf32>
    %347 = vector.shape_cast %346 : vector<1x4x32xf32> to vector<4x32xf32>
    %348 = vector.shape_cast %344 : vector<4x32xf32> to vector<1x4x32xf32>
    tpu.vector_store %arg14[%345, %c0_127, %c0_128], %348 {strides = array<i32>} : memref<8x4x32xf32, #tpu.memory_space<vmem>>, vector<1x4x32xf32>,
    %c4_i32_129 = arith.constant 4 : i32
    %349 = arith.index_cast %c4_i32_129 : i32 to index
    %c0_130 = arith.constant 0 : index
    %c0_131 = arith.constant 0 : index
    %350 = vector.load %arg13[%349, %c0_130, %c0_131] : memref<8x4x128xf32, #tpu.memory_space<vmem>>, vector<1x4x128xf32>
    %351 = vector.shape_cast %350 : vector<1x4x128xf32> to vector<4x128xf32>
    %cst_132 = arith.constant dense<0.000000e+00> : vector<4x128xf32>
    %352 = tpu.matmul %344, %238, %cst_132 {dimension_numbers = #tpu.dot_dimension_numbers<[1], [0], [0], [1], [0, 0, 1, 1], [], []>} : vector<4x32xf32>, vector<32x128xf32>, vector<4x128xf32> -> vector<4x128xf32>
    %353 = arith.addf %351, %352 : vector<4x128xf32>
    %354 = arith.negf %353 : vector<4x128xf32>
    %355 = math.exp %354 : vector<4x128xf32>
    %cst_133 = arith.constant 1.000000e+00 : f32
    %356 = vector.broadcast %cst_133 : f32 to vector<4x128xf32>
    %357 = arith.addf %356, %355 : vector<4x128xf32>
    %358 = arith.divf %356, %357 : vector<4x128xf32>
    %359 = vector.extract_strided_slice %358 {offsets = [0, 0], sizes = [4, 32], strides = [1, 1]} : vector<4x128xf32> to vector<4x32xf32>
    %360 = vector.extract_strided_slice %358 {offsets = [0, 32], sizes = [4, 32], strides = [1, 1]} : vector<4x128xf32> to vector<4x32xf32>
    %361 = vector.extract_strided_slice %358 {offsets = [0, 64], sizes = [4, 32], strides = [1, 1]} : vector<4x128xf32> to vector<4x32xf32>
    %cst_134 = arith.constant 2.000000e+00 : f32
    %362 = vector.broadcast %cst_134 : f32 to vector<4x32xf32>
    %363 = arith.mulf %362, %361 : vector<4x32xf32>
    %cst_135 = arith.constant 1.000000e+00 : f32
    %364 = vector.broadcast %cst_135 : f32 to vector<4x32xf32>
    %365 = arith.subf %363, %364 : vector<4x32xf32>
    %366 = vector.extract_strided_slice %358 {offsets = [0, 96], sizes = [4, 32], strides = [1, 1]} : vector<4x128xf32> to vector<4x32xf32>
    %367 = arith.mulf %360, %342 : vector<4x32xf32>
    %368 = arith.mulf %359, %365 : vector<4x32xf32>
    %369 = arith.addf %367, %368 : vector<4x32xf32>
    %370 = math.tanh %369 : vector<4x32xf32>
    %371 = arith.mulf %366, %370 : vector<4x32xf32>
    %372 = arith.index_cast %c4_i32_129 : i32 to index
    %c0_136 = arith.constant 0 : index
    %c0_137 = arith.constant 0 : index
    %373 = vector.load %arg14[%372, %c0_136, %c0_137] : memref<8x4x32xf32, #tpu.memory_space<vmem>>, vector<1x4x32xf32>
    %374 = vector.shape_cast %373 : vector<1x4x32xf32> to vector<4x32xf32>
    %375 = vector.shape_cast %371 : vector<4x32xf32> to vector<1x4x32xf32>
    tpu.vector_store %arg14[%372, %c0_136, %c0_137], %375 {strides = array<i32>} : memref<8x4x32xf32, #tpu.memory_space<vmem>>, vector<1x4x32xf32>,
    %c5_i32_138 = arith.constant 5 : i32
    %376 = arith.index_cast %c5_i32_138 : i32 to index
    %c0_139 = arith.constant 0 : index
    %c0_140 = arith.constant 0 : index
    %377 = vector.load %arg13[%376, %c0_139, %c0_140] : memref<8x4x128xf32, #tpu.memory_space<vmem>>, vector<1x4x128xf32>
    %378 = vector.shape_cast %377 : vector<1x4x128xf32> to vector<4x128xf32>
    %cst_141 = arith.constant dense<0.000000e+00> : vector<4x128xf32>
    %379 = tpu.matmul %371, %238, %cst_141 {dimension_numbers = #tpu.dot_dimension_numbers<[1], [0], [0], [1], [0, 0, 1, 1], [], []>} : vector<4x32xf32>, vector<32x128xf32>, vector<4x128xf32> -> vector<4x128xf32>
    %380 = arith.addf %378, %379 : vector<4x128xf32>
    %381 = arith.negf %380 : vector<4x128xf32>
    %382 = math.exp %381 : vector<4x128xf32>
    %cst_142 = arith.constant 1.000000e+00 : f32
    %383 = vector.broadcast %cst_142 : f32 to vector<4x128xf32>
    %384 = arith.addf %383, %382 : vector<4x128xf32>
    %385 = arith.divf %383, %384 : vector<4x128xf32>
    %386 = vector.extract_strided_slice %385 {offsets = [0, 0], sizes = [4, 32], strides = [1, 1]} : vector<4x128xf32> to vector<4x32xf32>
    %387 = vector.extract_strided_slice %385 {offsets = [0, 32], sizes = [4, 32], strides = [1, 1]} : vector<4x128xf32> to vector<4x32xf32>
    %388 = vector.extract_strided_slice %385 {offsets = [0, 64], sizes = [4, 32], strides = [1, 1]} : vector<4x128xf32> to vector<4x32xf32>
    %cst_143 = arith.constant 2.000000e+00 : f32
    %389 = vector.broadcast %cst_143 : f32 to vector<4x32xf32>
    %390 = arith.mulf %389, %388 : vector<4x32xf32>
    %cst_144 = arith.constant 1.000000e+00 : f32
    %391 = vector.broadcast %cst_144 : f32 to vector<4x32xf32>
    %392 = arith.subf %390, %391 : vector<4x32xf32>
    %393 = vector.extract_strided_slice %385 {offsets = [0, 96], sizes = [4, 32], strides = [1, 1]} : vector<4x128xf32> to vector<4x32xf32>
    %394 = arith.mulf %387, %369 : vector<4x32xf32>
    %395 = arith.mulf %386, %392 : vector<4x32xf32>
    %396 = arith.addf %394, %395 : vector<4x32xf32>
    %397 = math.tanh %396 : vector<4x32xf32>
    %398 = arith.mulf %393, %397 : vector<4x32xf32>
    %399 = arith.index_cast %c5_i32_138 : i32 to index
    %c0_145 = arith.constant 0 : index
    %c0_146 = arith.constant 0 : index
    %400 = vector.load %arg14[%399, %c0_145, %c0_146] : memref<8x4x32xf32, #tpu.memory_space<vmem>>, vector<1x4x32xf32>
    %401 = vector.shape_cast %400 : vector<1x4x32xf32> to vector<4x32xf32>
    %402 = vector.shape_cast %398 : vector<4x32xf32> to vector<1x4x32xf32>
    tpu.vector_store %arg14[%399, %c0_145, %c0_146], %402 {strides = array<i32>} : memref<8x4x32xf32, #tpu.memory_space<vmem>>, vector<1x4x32xf32>,
    %c6_i32_147 = arith.constant 6 : i32
    %403 = arith.index_cast %c6_i32_147 : i32 to index
    %c0_148 = arith.constant 0 : index
    %c0_149 = arith.constant 0 : index
    %404 = vector.load %arg13[%403, %c0_148, %c0_149] : memref<8x4x128xf32, #tpu.memory_space<vmem>>, vector<1x4x128xf32>
    %405 = vector.shape_cast %404 : vector<1x4x128xf32> to vector<4x128xf32>
    %cst_150 = arith.constant dense<0.000000e+00> : vector<4x128xf32>
    %406 = tpu.matmul %398, %238, %cst_150 {dimension_numbers = #tpu.dot_dimension_numbers<[1], [0], [0], [1], [0, 0, 1, 1], [], []>} : vector<4x32xf32>, vector<32x128xf32>, vector<4x128xf32> -> vector<4x128xf32>
    %407 = arith.addf %405, %406 : vector<4x128xf32>
    %408 = arith.negf %407 : vector<4x128xf32>
    %409 = math.exp %408 : vector<4x128xf32>
    %cst_151 = arith.constant 1.000000e+00 : f32
    %410 = vector.broadcast %cst_151 : f32 to vector<4x128xf32>
    %411 = arith.addf %410, %409 : vector<4x128xf32>
    %412 = arith.divf %410, %411 : vector<4x128xf32>
    %413 = vector.extract_strided_slice %412 {offsets = [0, 0], sizes = [4, 32], strides = [1, 1]} : vector<4x128xf32> to vector<4x32xf32>
    %414 = vector.extract_strided_slice %412 {offsets = [0, 32], sizes = [4, 32], strides = [1, 1]} : vector<4x128xf32> to vector<4x32xf32>
    %415 = vector.extract_strided_slice %412 {offsets = [0, 64], sizes = [4, 32], strides = [1, 1]} : vector<4x128xf32> to vector<4x32xf32>
    %cst_152 = arith.constant 2.000000e+00 : f32
    %416 = vector.broadcast %cst_152 : f32 to vector<4x32xf32>
    %417 = arith.mulf %416, %415 : vector<4x32xf32>
    %cst_153 = arith.constant 1.000000e+00 : f32
    %418 = vector.broadcast %cst_153 : f32 to vector<4x32xf32>
    %419 = arith.subf %417, %418 : vector<4x32xf32>
    %420 = vector.extract_strided_slice %412 {offsets = [0, 96], sizes = [4, 32], strides = [1, 1]} : vector<4x128xf32> to vector<4x32xf32>
    %421 = arith.mulf %414, %396 : vector<4x32xf32>
    %422 = arith.mulf %413, %419 : vector<4x32xf32>
    %423 = arith.addf %421, %422 : vector<4x32xf32>
    %424 = math.tanh %423 : vector<4x32xf32>
    %425 = arith.mulf %420, %424 : vector<4x32xf32>
    %426 = arith.index_cast %c6_i32_147 : i32 to index
    %c0_154 = arith.constant 0 : index
    %c0_155 = arith.constant 0 : index
    %427 = vector.load %arg14[%426, %c0_154, %c0_155] : memref<8x4x32xf32, #tpu.memory_space<vmem>>, vector<1x4x32xf32>
    %428 = vector.shape_cast %427 : vector<1x4x32xf32> to vector<4x32xf32>
    %429 = vector.shape_cast %425 : vector<4x32xf32> to vector<1x4x32xf32>
    tpu.vector_store %arg14[%426, %c0_154, %c0_155], %429 {strides = array<i32>} : memref<8x4x32xf32, #tpu.memory_space<vmem>>, vector<1x4x32xf32>,
    %c7_i32_156 = arith.constant 7 : i32
    %430 = arith.index_cast %c7_i32_156 : i32 to index
    %c0_157 = arith.constant 0 : index
    %c0_158 = arith.constant 0 : index
    %431 = vector.load %arg13[%430, %c0_157, %c0_158] : memref<8x4x128xf32, #tpu.memory_space<vmem>>, vector<1x4x128xf32>
    %432 = vector.shape_cast %431 : vector<1x4x128xf32> to vector<4x128xf32>
    %cst_159 = arith.constant dense<0.000000e+00> : vector<4x128xf32>
    %433 = tpu.matmul %425, %238, %cst_159 {dimension_numbers = #tpu.dot_dimension_numbers<[1], [0], [0], [1], [0, 0, 1, 1], [], []>} : vector<4x32xf32>, vector<32x128xf32>, vector<4x128xf32> -> vector<4x128xf32>
    %434 = arith.addf %432, %433 : vector<4x128xf32>
    %435 = arith.negf %434 : vector<4x128xf32>
    %436 = math.exp %435 : vector<4x128xf32>
    %cst_160 = arith.constant 1.000000e+00 : f32
    %437 = vector.broadcast %cst_160 : f32 to vector<4x128xf32>
    %438 = arith.addf %437, %436 : vector<4x128xf32>
    %439 = arith.divf %437, %438 : vector<4x128xf32>
    %440 = vector.extract_strided_slice %439 {offsets = [0, 0], sizes = [4, 32], strides = [1, 1]} : vector<4x128xf32> to vector<4x32xf32>
    %441 = vector.extract_strided_slice %439 {offsets = [0, 32], sizes = [4, 32], strides = [1, 1]} : vector<4x128xf32> to vector<4x32xf32>
    %442 = vector.extract_strided_slice %439 {offsets = [0, 64], sizes = [4, 32], strides = [1, 1]} : vector<4x128xf32> to vector<4x32xf32>
    %cst_161 = arith.constant 2.000000e+00 : f32
    %443 = vector.broadcast %cst_161 : f32 to vector<4x32xf32>
    %444 = arith.mulf %443, %442 : vector<4x32xf32>
    %cst_162 = arith.constant 1.000000e+00 : f32
    %445 = vector.broadcast %cst_162 : f32 to vector<4x32xf32>
    %446 = arith.subf %444, %445 : vector<4x32xf32>
    %447 = vector.extract_strided_slice %439 {offsets = [0, 96], sizes = [4, 32], strides = [1, 1]} : vector<4x128xf32> to vector<4x32xf32>
    %448 = arith.mulf %441, %423 : vector<4x32xf32>
    %449 = arith.mulf %440, %446 : vector<4x32xf32>
    %450 = arith.addf %448, %449 : vector<4x32xf32>
    %451 = math.tanh %450 : vector<4x32xf32>
    %452 = arith.mulf %447, %451 : vector<4x32xf32>
    %453 = arith.index_cast %c7_i32_156 : i32 to index
    %c0_163 = arith.constant 0 : index
    %c0_164 = arith.constant 0 : index
    %454 = vector.load %arg14[%453, %c0_163, %c0_164] : memref<8x4x32xf32, #tpu.memory_space<vmem>>, vector<1x4x32xf32>
    %455 = vector.shape_cast %454 : vector<1x4x32xf32> to vector<4x32xf32>
    %456 = vector.shape_cast %452 : vector<4x32xf32> to vector<1x4x32xf32>
    tpu.vector_store %arg14[%453, %c0_163, %c0_164], %456 {strides = array<i32>} : memref<8x4x32xf32, #tpu.memory_space<vmem>>, vector<1x4x32xf32>,
    %c8_i32_165 = arith.constant 8 : i32
    %c0_166 = arith.constant 0 : index
    %c0_167 = arith.constant 0 : index
    %c0_168 = arith.constant 0 : index
    %457 = vector.load %arg14[%c0_166, %c0_167, %c0_168] : memref<8x4x32xf32, #tpu.memory_space<vmem>>, vector<8x4x32xf32>
    %458 = vector.shape_cast %457 : vector<8x4x32xf32> to vector<32x32xf32>
    %cst_169 = arith.constant 0.000000e+00 : f32
    %459 = vector.broadcast %cst_169 : f32 to vector<32x32xf32>
    %460 = arith.maximumf %458, %459 : vector<32x32xf32>
    %c0_170 = arith.constant 0 : index
    %c0_171 = arith.constant 0 : index
    %461 = vector.load %arg8[%c0_170, %c0_171] : memref<32x32xf32, #tpu.memory_space<vmem>>, vector<32x32xf32>
    %cst_172 = arith.constant dense<0.000000e+00> : vector<32x32xf32>
    %462 = tpu.matmul %460, %461, %cst_172 {dimension_numbers = #tpu.dot_dimension_numbers<[1], [0], [0], [1], [0, 0, 1, 1], [], []>} : vector<32x32xf32>, vector<32x32xf32>, vector<32x32xf32> -> vector<32x32xf32>
    %c0_173 = arith.constant 0 : index
    %c0_174 = arith.constant 0 : index
    %463 = vector.load %arg9[%c0_173, %c0_174] : memref<1x32xf32, #tpu.memory_space<vmem>>, vector<1x32xf32>
    %464 = vector.broadcast %463 : vector<1x32xf32> to vector<32x32xf32>
    %465 = arith.addf %462, %464 : vector<32x32xf32>
    %cst_175 = arith.constant 0.000000e+00 : f32
    %466 = vector.broadcast %cst_175 : f32 to vector<32x32xf32>
    %467 = arith.maximumf %465, %466 : vector<32x32xf32>
    %c0_176 = arith.constant 0 : index
    %c0_177 = arith.constant 0 : index
    %468 = vector.load %arg10[%c0_176, %c0_177] : memref<32x128xf32, #tpu.memory_space<vmem>>, vector<32x128xf32>
    %cst_178 = arith.constant dense<0.000000e+00> : vector<32x128xf32>
    %469 = tpu.matmul %467, %468, %cst_178 {dimension_numbers = #tpu.dot_dimension_numbers<[1], [0], [0], [1], [0, 0, 1, 1], [], []>} : vector<32x32xf32>, vector<32x128xf32>, vector<32x128xf32> -> vector<32x128xf32>
    %c0_179 = arith.constant 0 : index
    %c0_180 = arith.constant 0 : index
    %470 = vector.load %arg11[%c0_179, %c0_180] : memref<1x128xf32, #tpu.memory_space<vmem>>, vector<1x128xf32>
    %471 = vector.broadcast %470 : vector<1x128xf32> to vector<32x128xf32>
    %472 = arith.addf %469, %471 : vector<32x128xf32>
    %473 = vector.shape_cast %472 : vector<32x128xf32> to vector<8x4x128xf32>
    %c0_181 = arith.constant 0 : index
    %c0_182 = arith.constant 0 : index
    %c0_183 = arith.constant 0 : index
    %c0_184 = arith.constant 0 : index
    %474 = vector.load %arg12[%c0_181, %c0_182, %c0_183, %c0_184] : memref<1x8x4x128xf32, #tpu.memory_space<vmem>>, vector<1x8x4x128xf32>
    %475 = vector.shape_cast %474 : vector<1x8x4x128xf32> to vector<8x4x128xf32>
    %476 = vector.shape_cast %473 : vector<8x4x128xf32> to vector<1x8x4x128xf32>
    tpu.vector_store %arg12[%c0_181, %c0_182, %c0_183, %c0_184], %476 {strides = array<i32>} : memref<1x8x4x128xf32, #tpu.memory_space<vmem>>, vector<1x8x4x128xf32>,
    return
  }
  func.func @transform_0(%arg0: i32) -> (i32, i32, i32, i32) {
    %c0_i32 = arith.constant 0 : i32
    %c0_i32_0 = arith.constant 0 : i32
    %c0_i32_1 = arith.constant 0 : i32
    %c0_i32_2 = arith.constant 0 : i32
    return %arg0, %c0_i32, %c0_i32_0, %c0_i32_1 : i32, i32, i32, i32
  }
  func.func @transform_1(%arg0: i32) -> (i32, i32) {
    %c0_i32 = arith.constant 0 : i32
    %c0_i32_0 = arith.constant 0 : i32
    %c0_i32_1 = arith.constant 0 : i32
    return %c0_i32, %c0_i32_0 : i32, i32
  }
  func.func @transform_2(%arg0: i32) -> (i32, i32) {
    %c0_i32 = arith.constant 0 : i32
    %c0_i32_0 = arith.constant 0 : i32
    %c0_i32_1 = arith.constant 0 : i32
    return %c0_i32, %c0_i32_0 : i32, i32
  }
  func.func @transform_3(%arg0: i32) -> (i32, i32) {
    %c0_i32 = arith.constant 0 : i32
    %c0_i32_0 = arith.constant 0 : i32
    %c0_i32_1 = arith.constant 0 : i32
    return %c0_i32, %c0_i32_0 : i32, i32
  }
  func.func @transform_4(%arg0: i32) -> (i32, i32) {
    %c0_i32 = arith.constant 0 : i32
    %c0_i32_0 = arith.constant 0 : i32
    %c0_i32_1 = arith.constant 0 : i32
    return %c0_i32, %c0_i32_0 : i32, i32
  }
  func.func @transform_5(%arg0: i32) -> (i32, i32) {
    %c0_i32 = arith.constant 0 : i32
    %c0_i32_0 = arith.constant 0 : i32
    %c0_i32_1 = arith.constant 0 : i32
    return %c0_i32, %c0_i32_0 : i32, i32
  }
  func.func @transform_6(%arg0: i32) -> (i32, i32) {
    %c0_i32 = arith.constant 0 : i32
    %c0_i32_0 = arith.constant 0 : i32
    %c0_i32_1 = arith.constant 0 : i32
    return %c0_i32, %c0_i32_0 : i32, i32
  }
  func.func @transform_7(%arg0: i32) -> (i32, i32) {
    %c0_i32 = arith.constant 0 : i32
    %c0_i32_0 = arith.constant 0 : i32
    %c0_i32_1 = arith.constant 0 : i32
    return %c0_i32, %c0_i32_0 : i32, i32
  }
  func.func @transform_8(%arg0: i32) -> (i32, i32) {
    %c0_i32 = arith.constant 0 : i32
    %c0_i32_0 = arith.constant 0 : i32
    %c0_i32_1 = arith.constant 0 : i32
    return %c0_i32, %c0_i32_0 : i32, i32
  }
  func.func @transform_9(%arg0: i32) -> (i32, i32) {
    %c0_i32 = arith.constant 0 : i32
    %c0_i32_0 = arith.constant 0 : i32
    %c0_i32_1 = arith.constant 0 : i32
    return %c0_i32, %c0_i32_0 : i32, i32
  }
  func.func @transform_10(%arg0: i32) -> (i32, i32) {
    %c0_i32 = arith.constant 0 : i32
    %c0_i32_0 = arith.constant 0 : i32
    %c0_i32_1 = arith.constant 0 : i32
    return %c0_i32, %c0_i32_0 : i32, i32
  }
  func.func @transform_11(%arg0: i32) -> (i32, i32, i32, i32) {
    %c0_i32 = arith.constant 0 : i32
    %c0_i32_0 = arith.constant 0 : i32
    %c0_i32_1 = arith.constant 0 : i32
    %c0_i32_2 = arith.constant 0 : i32
    return %arg0, %c0_i32, %c0_i32_0, %c0_i32_1 : i32, i32, i32, i32
  }
}

</mosaic_0001>

<llo_original>
// kernel: tpu_custom_call.1
$region0: #{tpu_custom_call.1}
  #allocation0 [shape = 'u32[]', space=smem, size = 0x4, offset = 0x4, fixed_abs, tag = 'smem constant byte address 0x4 - core index']
  #allocation1 [shape = 'u32[72,128]{1,0:T(1,128)}', space=vmem, size = 0x9000, scoped, tag = 'internal scratch']
  #allocation2 [shape = 'f32[8,4,128]{2,1,0:T(4,128)}', space=vmem, size = 0x4000, scoped, tag = 'scratch operand']
  #allocation3 [shape = 'f32[8,4,32]{2,1,0:T(4,128)}', space=vmem, size = 0x4000, scoped, tag = 'scratch operand']
  %s0 = inlined_call_operand.hbm [shape: f32[1,8,4,16], index: 0, kind: input, shape index: {}]
  %s1 = inlined_call_operand.hbm [shape: f32[16,128], index: 1, kind: input, shape index: {}]
  %s2 = inlined_call_operand.hbm [shape: f32[32,128], index: 2, kind: input, shape index: {}]
  %s3 = inlined_call_operand.vmem [shape: f32[1,128], index: 3, kind: input, shape index: {}]
  %s4 = inlined_call_operand.hbm [shape: f32[32,128], index: 4, kind: input, shape index: {}]
  %s5 = inlined_call_operand.hbm [shape: f32[32,128], index: 5, kind: input, shape index: {}]
  %s6 = inlined_call_operand.vmem [shape: f32[1,128], index: 6, kind: input, shape index: {}]
  %s7 = inlined_call_operand.hbm [shape: f32[32,32], index: 7, kind: input, shape index: {}]
  %s8 = inlined_call_operand.vmem [shape: f32[1,32], index: 8, kind: input, shape index: {}]
  %s9 = inlined_call_operand.hbm [shape: f32[32,128], index: 9, kind: input, shape index: {}]
  %s10 = inlined_call_operand.vmem [shape: f32[1,128], index: 10, kind: input, shape index: {}]
  %s11 = inlined_call_operand.hbm [shape: f32[1,8,4,128], index: 11, kind: output, shape index: {}]
  %s12 = sld [smem:[#allocation0]]
  $region82: #{tpu_custom_call.1} parent=0
    _
  %s14 = ssub.s32 1, %s12
  %s15 = scalar_select 0, %s14, %s12
  $region1: #{tpu_custom_call.1} parent=0
    #allocation4 [shape = 'u8[16384]{0}', space=vmem, size = 0x4000, scoped, tag = 'input window, operand 0, single buffered']
    #allocation5 [shape = 's32[1]{0}', space=sflag, size = 0x4, scoped, tag = 'scoped memory for tpu_custom_call.1']
    #allocation6 [shape = 's32[1]{0}', space=sflag, size = 0x4, scoped, tag = 'scoped memory for tpu_custom_call.1']
    #allocation7 [shape = 'u8[8192]{0}', space=vmem, size = 0x2000, scoped, tag = 'input window, operand 1, single buffered']
    #allocation8 [shape = 's32[1]{0}', space=sflag, size = 0x4, scoped, tag = 'scoped memory for tpu_custom_call.1']
    #allocation9 [shape = 'u8[16384]{0}', space=vmem, size = 0x4000, scoped, tag = 'input window, operand 2, single buffered']
    #allocation10 [shape = 'u8[16384]{0}', space=vmem, size = 0x4000, scoped, tag = 'input window, operand 4, single buffered']
    #allocation11 [shape = 's32[1]{0}', space=sflag, size = 0x4, scoped, tag = 'scoped memory for tpu_custom_call.1']
    #allocation12 [shape = 'u8[16384]{0}', space=vmem, size = 0x4000, scoped, tag = 'input window, operand 5, single buffered']
    #allocation13 [shape = 'u8[16384]{0}', space=vmem, size = 0x4000, scoped, tag = 'input window, operand 7, single buffered']
    #allocation14 [shape = 's32[1]{0}', space=sflag, size = 0x4, scoped, tag = 'scoped memory for tpu_custom_call.1']
    #allocation15 [shape = 'u8[16384]{0}', space=vmem, size = 0x4000, scoped, tag = 'input window, operand 9, single buffered']
    #allocation16 [shape = 'u8[16384]{0}', space=vmem, size = 0x4000, scoped, tag = 'output window, operand 0, single buffered']
    %16 = vsyncpa [#allocation5], 0
    %17 = vsyncpa [#allocation8], 0
    %18 = vsyncpa [#allocation11], 0
    %19 = vsyncpa [#allocation14], 0
    %20 = vsyncpa [#allocation6], 0
    // Predicated region
    $region2: #{tpu_custom_call.1} parent=1 // pred_check
      _
    $region3: #{tpu_custom_call.1} parent=1 // pred_check_branch
      %22 = sbr.rel (0) target = $region5
    $region4: #{tpu_custom_call.1} parent=1 // pred_region
      %24 = vsyncadd [#allocation5], 0
      %s25 = sshll.u32 %s0, 4
      %s26 = int_to_ptr.hbm [resolvable:$true] %s25
      %s27 = sshll.u32 [#allocation4], 4
      %s28 = int_to_ptr.vmem [resolvable:$true] %s27
      %33 = dma.hbm_to_vmem [thread:$0]  %s26, 512, %s28, [#allocation5], 64, 64, 4
    $region5: #{tpu_custom_call.1} parent=1 // pred_fallthru
      _
    // Predicated region
    $region6: #{tpu_custom_call.1} parent=1 // pred_check
      _
    $region7: #{tpu_custom_call.1} parent=1 // pred_check_branch
      %35 = sbr.rel (0) target = $region9
    $region8: #{tpu_custom_call.1} parent=1 // pred_region
      %37 = vsyncadd [#allocation8], 0
      %s38 = sshll.u32 %s1, 4
      %s39 = int_to_ptr.hbm [resolvable:$true] %s38
      %s40 = sshll.u32 [#allocation7], 4
      %s41 = int_to_ptr.vmem [resolvable:$true] %s40
      %46 = dma.hbm_to_vmem [thread:$0]  %s39, 256, %s41, [#allocation8], 128, 128, 8
    $region9: #{tpu_custom_call.1} parent=1 // pred_fallthru
      _
    // Predicated region
    $region10: #{tpu_custom_call.1} parent=1 // pred_check
      _
    $region11: #{tpu_custom_call.1} parent=1 // pred_check_branch
      %48 = sbr.rel (0) target = $region13
    $region12: #{tpu_custom_call.1} parent=1 // pred_region
      %50 = vsyncadd [#allocation8], 0
      %s51 = sshll.u32 %s2, 4
      %s52 = int_to_ptr.hbm [resolvable:$true] %s51
      %s53 = sshll.u32 [#allocation9], 4
      %s54 = int_to_ptr.vmem [resolvable:$true] %s53
      %59 = dma.hbm_to_vmem [thread:$0]  %s52, 512, %s54, [#allocation8], 128, 128, 8
    $region13: #{tpu_custom_call.1} parent=1 // pred_fallthru
      _
    // Predicated region
    $region14: #{tpu_custom_call.1} parent=1 // pred_check
      _
    $region15: #{tpu_custom_call.1} parent=1 // pred_check_branch
      %61 = sbr.rel (0) target = $region17
    $region16: #{tpu_custom_call.1} parent=1 // pred_region
      _
    $region17: #{tpu_custom_call.1} parent=1 // pred_fallthru
      _
    // Predicated region
    $region18: #{tpu_custom_call.1} parent=1 // pred_check
      _
    $region19: #{tpu_custom_call.1} parent=1 // pred_check_branch
      %63 = sbr.rel (0) target = $region21
    $region20: #{tpu_custom_call.1} parent=1 // pred_region
      %65 = vsyncadd [#allocation11], 0
      %s66 = sshll.u32 %s4, 4
      %s67 = int_to_ptr.hbm [resolvable:$true] %s66
      %s68 = sshll.u32 [#allocation10], 4
      %s69 = int_to_ptr.vmem [resolvable:$true] %s68
      %74 = dma.hbm_to_vmem [thread:$0]  %s67, 512, %s69, [#allocation11], 128, 128, 8
    $region21: #{tpu_custom_call.1} parent=1 // pred_fallthru
      _
    // Predicated region
    $region22: #{tpu_custom_call.1} parent=1 // pred_check
      _
    $region23: #{tpu_custom_call.1} parent=1 // pred_check_branch
      %76 = sbr.rel (0) target = $region25
    $region24: #{tpu_custom_call.1} parent=1 // pred_region
      %78 = vsyncadd [#allocation11], 0
      %s79 = sshll.u32 %s5, 4
      %s80 = int_to_ptr.hbm [resolvable:$true] %s79
      %s81 = sshll.u32 [#allocation12], 4
      %s82 = int_to_ptr.vmem [resolvable:$true] %s81
      %87 = dma.hbm_to_vmem [thread:$0]  %s80, 512, %s82, [#allocation11], 128, 128, 8
    $region25: #{tpu_custom_call.1} parent=1 // pred_fallthru
      _
    // Predicated region
    $region26: #{tpu_custom_call.1} parent=1 // pred_check
      _
    $region27: #{tpu_custom_call.1} parent=1 // pred_check_branch
      %89 = sbr.rel (0) target = $region29
    $region28: #{tpu_custom_call.1} parent=1 // pred_region
      _
    $region29: #{tpu_custom_call.1} parent=1 // pred_fallthru
      _
    // Predicated region
    $region30: #{tpu_custom_call.1} parent=1 // pred_check
      _
    $region31: #{tpu_custom_call.1} parent=1 // pred_check_branch
      %91 = sbr.rel (0) target = $region33
    $region32: #{tpu_custom_call.1} parent=1 // pred_region
      %93 = vsyncadd [#allocation14], 0
      %s94 = sshll.u32 %s7, 4
      %s95 = int_to_ptr.hbm [resolvable:$true] %s94
      %s96 = sshll.u32 [#allocation13], 4
      %s97 = int_to_ptr.vmem [resolvable:$true] %s96
      %102 = dma.hbm_to_vmem [thread:$0]  %s95, 512, %s97, [#allocation14], 128, 128, 8
    $region33: #{tpu_custom_call.1} parent=1 // pred_fallthru
      _
    // Predicated region
    $region34: #{tpu_custom_call.1} parent=1 // pred_check
      _
    $region35: #{tpu_custom_call.1} parent=1 // pred_check_branch
      %104 = sbr.rel (0) target = $region37
    $region36: #{tpu_custom_call.1} parent=1 // pred_region
      _
    $region37: #{tpu_custom_call.1} parent=1 // pred_fallthru
      _
    // Predicated region
    $region38: #{tpu_custom_call.1} parent=1 // pred_check
      _
    $region39: #{tpu_custom_call.1} parent=1 // pred_check_branch
      %106 = sbr.rel (0) target = $region41
    $region40: #{tpu_custom_call.1} parent=1 // pred_region
      %108 = vsyncadd [#allocation14], 0
      %s109 = sshll.u32 %s9, 4
      %s110 = int_to_ptr.hbm [resolvable:$true] %s109
      %s111 = sshll.u32 [#allocation15], 4
      %s112 = int_to_ptr.vmem [resolvable:$true] %s111
      %117 = dma.hbm_to_vmem [thread:$0]  %s110, 512, %s112, [#allocation14], 128, 128, 8
    $region41: #{tpu_custom_call.1} parent=1 // pred_fallthru
      _
    // Predicated region
    $region42: #{tpu_custom_call.1} parent=1 // pred_check
      _
    $region43: #{tpu_custom_call.1} parent=1 // pred_check_branch
      %119 = sbr.rel (0) target = $region45
    $region44: #{tpu_custom_call.1} parent=1 // pred_region
      _
    $region45: #{tpu_custom_call.1} parent=1 // pred_fallthru
      _
    // Predicated region
    $region46: #{tpu_custom_call.1} parent=1 // pred_check
      _
    $region47: #{tpu_custom_call.1} parent=1 // pred_check_branch
      %121 = sbr.rel (0) target = $region49
    $region48: #{tpu_custom_call.1} parent=1 // pred_region
      %123 = dma.done [#allocation5], 512
    $region49: #{tpu_custom_call.1} parent=1 // pred_fallthru
      _
    // Predicated region
    $region50: #{tpu_custom_call.1} parent=1 // pred_check
      _
    $region51: #{tpu_custom_call.1} parent=1 // pred_check_branch
      %125 = sbr.rel (0) target = $region53
    $region52: #{tpu_custom_call.1} parent=1 // pred_region
      %127 = dma.done [#allocation8], 256
    $region53: #{tpu_custom_call.1} parent=1 // pred_fallthru
      _
    // Predicated region
    $region54: #{tpu_custom_call.1} parent=1 // pred_check
      _
    $region55: #{tpu_custom_call.1} parent=1 // pred_check_branch
      %129 = sbr.rel (0) target = $region57
    $region56: #{tpu_custom_call.1} parent=1 // pred_region
      %131 = dma.done [#allocation8], 512
    $region57: #{tpu_custom_call.1} parent=1 // pred_fallthru
      _
    // Predicated region
    $region58: #{tpu_custom_call.1} parent=1 // pred_check
      _
    $region59: #{tpu_custom_call.1} parent=1 // pred_check_branch
      %133 = sbr.rel (0) target = $region61
    $region60: #{tpu_custom_call.1} parent=1 // pred_region
      %135 = dma.done [#allocation11], 512
    $region61: #{tpu_custom_call.1} parent=1 // pred_fallthru
      _
    // Predicated region
    $region62: #{tpu_custom_call.1} parent=1 // pred_check
      _
    $region63: #{tpu_custom_call.1} parent=1 // pred_check_branch
      %137 = sbr.rel (0) target = $region65
    $region64: #{tpu_custom_call.1} parent=1 // pred_region
      %139 = dma.done [#allocation11], 512
    $region65: #{tpu_custom_call.1} parent=1 // pred_fallthru
      _
    // Predicated region
    $region66: #{tpu_custom_call.1} parent=1 // pred_check
      _
    $region67: #{tpu_custom_call.1} parent=1 // pred_check_branch
      %141 = sbr.rel (0) target = $region69
    $region68: #{tpu_custom_call.1} parent=1 // pred_region
      %143 = dma.done [#allocation14], 512
    $region69: #{tpu_custom_call.1} parent=1 // pred_fallthru
      _
    // Predicated region
    $region70: #{tpu_custom_call.1} parent=1 // pred_check
      _
    $region71: #{tpu_custom_call.1} parent=1 // pred_check_branch
      %145 = sbr.rel (0) target = $region73
    $region72: #{tpu_custom_call.1} parent=1 // pred_region
      %147 = dma.done [#allocation14], 512
    $region73: #{tpu_custom_call.1} parent=1 // pred_fallthru
      _
    %v148 = vld [vmem:[#allocation4] sm:$0xf]
    %v149 = vld [vmem:[#allocation4 + $0x4] sm:$0xf]
    %v150 = vld [vmem:[#allocation4 + $0x8] sm:$0xf]
    %v151 = vld [vmem:[#allocation4 + $0xc] sm:$0xf]
    %v152 = vld [vmem:[#allocation4 + $0x10] sm:$0xf]
    %v153 = vld [vmem:[#allocation4 + $0x14] sm:$0xf]
    %v154 = vld [vmem:[#allocation4 + $0x18] sm:$0xf]
    %v155 = vld [vmem:[#allocation4 + $0x1c] sm:$0xf]
    %v156 = vld [vmem:[#allocation7] sm:$0xff]
    %v157 = vld [vmem:[#allocation7 + $0x8] sm:$0xff]
    %v158 = vld [vmem:[%s3] sm:$0x1]
    %v160 = vperm.slane %v158, 0
    %170 = vst [vmem:[#allocation1] ss:$2 sm:$0xff] %v148
    %s171 = scalar_lea.vmem [#allocation1], 1
    %172 = vst [vmem:[%s171] ss:$2 sm:$0xff] %v149
    %s173 = scalar_lea.vmem [#allocation1], 16
    %174 = vst [vmem:[%s173] ss:$2 sm:$0xff] %v150
    %s175 = scalar_lea.vmem [#allocation1], 17
    %176 = vst [vmem:[%s175] ss:$2 sm:$0xff] %v151
    %s177 = scalar_lea.vmem [#allocation1], 32
    %178 = vst [vmem:[%s177] ss:$2 sm:$0xff] %v152
    %s179 = scalar_lea.vmem [#allocation1], 33
    %180 = vst [vmem:[%s179] ss:$2 sm:$0xff] %v153
    %s181 = scalar_lea.vmem [#allocation1], 48
    %182 = vst [vmem:[%s181] ss:$2 sm:$0xff] %v154
    %s183 = scalar_lea.vmem [#allocation1], 49
    %184 = vst [vmem:[%s183] ss:$2 sm:$0xff] %v155
    %v185 = vld.sshfl [vmem:[#allocation1] sm:$0xff pattern:$0x75316420]
    %v186 = vld.sshfl [vmem:[#allocation1 + $0x10] sm:$0xff pattern:$0x75316420]
    %v187 = vld.sshfl [vmem:[#allocation1 + $0x20] sm:$0xff pattern:$0x75316420]
    %v188 = vld.sshfl [vmem:[#allocation1 + $0x30] sm:$0xff pattern:$0x75316420]
    %vm189 = vcmask 130048
    %v190 = vsel %vm189, %v185, 0
    %v192 = vsel %vm189, %v186, 0
    %v194 = vsel %vm189, %v187, 0
    %v196 = vsel %vm189, %v188, 0
    %198 = vmatpush.msra.mxu0 0.0
    %199 = vmatpush.msra.mxu0 0.0
    %200 = vmatpush.msra.mxu0 0.0
    %201 = vmatpush.msra.mxu0 0.0
    %202 = vmatpush.msra.mxu0 0.0
    %203 = vmatpush.msra.mxu0 0.0
    %204 = vmatpush.msra.mxu0 0.0
    %205 = vmatpush.msra.mxu0 0.0
    %206 = vmatpush.msra.mxu0 0.0
    %207 = vmatpush.msra.mxu0 0.0
    %208 = vmatpush.msra.mxu0 0.0
    %209 = vmatpush.msra.mxu0 0.0
    %210 = vmatpush.msra.mxu0 0.0
    %211 = vmatpush.msra.mxu0 0.0
    %212 = vmatpush.msra.mxu0 %v157
    %213 = vmatpush.msra.mxu0 %v156
    %214 = vmatmul.f32.gmra.mxu0 %v190
    %v215 = vpop.f32.mrf.mxu0
    %v216 = vadd.f32 %v160, %v215
    %217 = vmatmul.f32.gmra.mxu0 %v192
    %v218 = vpop.f32.mrf.mxu0
    %v219 = vadd.f32 %v160, %v218
    %220 = vmatmul.f32.gmra.mxu0 %v194
    %v221 = vpop.f32.mrf.mxu0
    %v222 = vadd.f32 %v160, %v221
    %223 = vmatmul.f32.gmra.mxu0 %v196
    %v224 = vpop.f32.mrf.mxu0
    %v225 = vadd.f32 %v160, %v224
    %226 = vdwg.mxu0
    %v231 = vrot.slane %v216, 4
    %v232 = vrot.slane %v219, 4
    %v233 = vrot.slane %v222, 4
    %v234 = vrot.slane %v225, 4
    %239 = vst [vmem:[#allocation2] sm:$0xf] %v216
    %240 = vst [vmem:[#allocation2 + $0x4] sm:$0xf] %v231
    %241 = vst [vmem:[#allocation2 + $0x8] sm:$0xf] %v219
    %242 = vst [vmem:[#allocation2 + $0xc] sm:$0xf] %v232
    %243 = vst [vmem:[#allocation2 + $0x10] sm:$0xf] %v222
    %244 = vst [vmem:[#allocation2 + $0x14] sm:$0xf] %v233
    %245 = vst [vmem:[#allocation2 + $0x18] sm:$0xf] %v225
    %246 = vst [vmem:[#allocation2 + $0x1c] sm:$0xf] %v234
    %v247 = vld [vmem:[#allocation9] sm:$0xff]
    %v248 = vld [vmem:[#allocation9 + $0x8] sm:$0xff]
    %v249 = vld [vmem:[#allocation9 + $0x10] sm:$0xff]
    %v250 = vld [vmem:[#allocation9 + $0x18] sm:$0xff]
    %v251 = vld [vmem:[#allocation2] sm:$0xf]
    %vm252 = vcmask 261120
    %v254 = vsel %vm252, 0.0, 0
    %256 = vmatpush.msra.mxu0 0.0
    %257 = vmatpush.msra.mxu0 0.0
    %258 = vmatpush.msra.mxu0 0.0
    %259 = vmatpush.msra.mxu0 0.0
    %260 = vmatpush.msra.mxu0 0.0
    %261 = vmatpush.msra.mxu0 0.0
    %262 = vmatpush.msra.mxu0 0.0
    %263 = vmatpush.msra.mxu0 0.0
    %264 = vmatpush.msra.mxu0 0.0
    %265 = vmatpush.msra.mxu0 0.0
    %266 = vmatpush.msra.mxu0 0.0
    %267 = vmatpush.msra.mxu0 0.0
    %268 = vmatpush.msra.mxu0 %v250
    %269 = vmatpush.msra.mxu0 %v249
    %270 = vmatpush.msra.mxu0 %v248
    %271 = vmatpush.msra.mxu0 %v247
    %272 = vmatmul.f32.gmra.mxu0 %v254
    %v273 = vpop.f32.mrf.mxu0
    %v274 = vadd.f32 0.0, %v273
    %275 = vdwg.mxu0
    %v276 = vadd.f32 %v251, %v274
    %v277 = vxor.u32 %v276, 2147483648
    %v278 = vmul.f32 %v277, 1.442695
    %v279 = vpow.pop %v278
    %v280 = vadd.f32 %v279, 1.0
    %v281 = vrcp.pop %v280
    %v282 = vmul.f32 %v280, %v281
    %v283 = vsub.f32 1.0, %v282
    %v284 = vmul.f32 %v281, %v283
    %v285 = vadd.f32 %v281, %v284
    %vm286 = vweird.f32 %v280
    %vm287 = vweird.f32 %v281
    %vm288 = vmor %vm286, %vm287
    %v289 = vsel %vm288, %v281, %v285
    %v290 = vand.u32 2147483647, %v280
    %vm291 = vcmp.eq.f32.partialorder %v290, 8.507059e+37
    %v292 = vand.u32 %v280, 2147483648
    %v293 = vor.u32 1.1754944e-38, %v292
    %v294 = vsel %vm291, %v293, %v289
    %v295 = vmul.f32 1.0, %v294
    %v296 = vmul.f32 %v295, 2.0
    %v297 = vsub.f32 %v296, 1.0
    %v298 = vmul.f32 %v295, 0.0
    %300 = vrot.lane.b32.xlu0 %v297, 64
    %v301 = vpop.permute.xlu0 %300
    %v303 = vmul.f32 %v295, %v301
    %305 = vrot.lane.b32.xlu0 %v303, 32
    %v306 = vpop.permute.xlu0 %305
    %v308 = vadd.f32 %v298, %v306
    %v309 = vtanh.pop %v308
    %311 = vrot.lane.b32.xlu0 %v309, 64
    %v312 = vpop.permute.xlu0 %311
    %v314 = vmul.f32 %v295, %v312
    %316 = vrot.lane.b32.xlu0 %v314, 32
    %v317 = vpop.permute.xlu0 %316
    %vm319 = vcmask 257024
    %320 = vst.msk [vmem:[#allocation3] sm:$0xf] %vm319, %v317
    %s321 = scalar_lea.vmem [#allocation2], 4
    %v322 = vld [vmem:[%s321] sm:$0xf]
    %v323 = vsel %vm252, %v317, 0
    %325 = vmatpush.msra.mxu0 0.0
    %326 = vmatpush.msra.mxu0 0.0
    %327 = vmatpush.msra.mxu0 0.0
    %328 = vmatpush.msra.mxu0 0.0
    %329 = vmatpush.msra.mxu0 0.0
    %330 = vmatpush.msra.mxu0 0.0
    %331 = vmatpush.msra.mxu0 0.0
    %332 = vmatpush.msra.mxu0 0.0
    %333 = vmatpush.msra.mxu0 0.0
    %334 = vmatpush.msra.mxu0 0.0
    %335 = vmatpush.msra.mxu0 0.0
    %336 = vmatpush.msra.mxu0 0.0
    %337 = vmatpush.msra.mxu0 %v250
    %338 = vmatpush.msra.mxu0 %v249
    %339 = vmatpush.msra.mxu0 %v248
    %340 = vmatpush.msra.mxu0 %v247
    %341 = vmatmul.f32.gmra.mxu0 %v323
    %v342 = vpop.f32.mrf.mxu0
    %v343 = vadd.f32 0.0, %v342
    %344 = vdwg.mxu0
    %v345 = vadd.f32 %v322, %v343
    %v346 = vxor.u32 %v345, 2147483648
    %v347 = vmul.f32 %v346, 1.442695
    %v348 = vpow.pop %v347
    %v349 = vadd.f32 %v348, 1.0
    %v350 = vrcp.pop %v349
    %v351 = vmul.f32 %v349, %v350
    %v352 = vsub.f32 1.0, %v351
    %v353 = vmul.f32 %v350, %v352
    %v354 = vadd.f32 %v350, %v353
    %vm355 = vweird.f32 %v349
    %vm356 = vweird.f32 %v350
    %vm357 = vmor %vm355, %vm356
    %v358 = vsel %vm357, %v350, %v354
    %v359 = vand.u32 2147483647, %v349
    %vm360 = vcmp.eq.f32.partialorder %v359, 8.507059e+37
    %v361 = vand.u32 %v349, 2147483648
    %v362 = vor.u32 1.1754944e-38, %v361
    %v363 = vsel %vm360, %v362, %v358
    %v364 = vmul.f32 1.0, %v363
    %v365 = vmul.f32 %v364, 2.0
    %v366 = vsub.f32 %v365, 1.0
    %v367 = vmul.f32 %v364, %v308
    %369 = vrot.lane.b32.xlu0 %v366, 64
    %v370 = vpop.permute.xlu0 %369
    %v372 = vmul.f32 %v364, %v370
    %374 = vrot.lane.b32.xlu0 %v372, 32
    %v375 = vpop.permute.xlu0 %374
    %v377 = vadd.f32 %v367, %v375
    %v378 = vtanh.pop %v377
    %380 = vrot.lane.b32.xlu0 %v378, 64
    %v381 = vpop.permute.xlu0 %380
    %v383 = vmul.f32 %v364, %v381
    %385 = vrot.lane.b32.xlu0 %v383, 32
    %v386 = vpop.permute.xlu0 %385
    %s388 = scalar_lea.vmem [#allocation3], 4
    %389 = vst.msk [vmem:[%s388] sm:$0xf] %vm319, %v386
    %s390 = scalar_lea.vmem [#allocation2], 8
    %v391 = vld [vmem:[%s390] sm:$0xf]
    %v392 = vsel %vm252, %v386, 0
    %394 = vmatpush.msra.mxu0 0.0
    %395 = vmatpush.msra.mxu0 0.0
    %396 = vmatpush.msra.mxu0 0.0
    %397 = vmatpush.msra.mxu0 0.0
    %398 = vmatpush.msra.mxu0 0.0
    %399 = vmatpush.msra.mxu0 0.0
    %400 = vmatpush.msra.mxu0 0.0
    %401 = vmatpush.msra.mxu0 0.0
    %402 = vmatpush.msra.mxu0 0.0
    %403 = vmatpush.msra.mxu0 0.0
    %404 = vmatpush.msra.mxu0 0.0
    %405 = vmatpush.msra.mxu0 0.0
    %406 = vmatpush.msra.mxu0 %v250
    %407 = vmatpush.msra.mxu0 %v249
    %408 = vmatpush.msra.mxu0 %v248
    %409 = vmatpush.msra.mxu0 %v247
    %410 = vmatmul.f32.gmra.mxu0 %v392
    %v411 = vpop.f32.mrf.mxu0
    %v412 = vadd.f32 0.0, %v411
    %413 = vdwg.mxu0
    %v414 = vadd.f32 %v391, %v412
    %v415 = vxor.u32 %v414, 2147483648
    %v416 = vmul.f32 %v415, 1.442695
    %v417 = vpow.pop %v416
    %v418 = vadd.f32 %v417, 1.0
    %v419 = vrcp.pop %v418
    %v420 = vmul.f32 %v418, %v419
    %v421 = vsub.f32 1.0, %v420
    %v422 = vmul.f32 %v419, %v421
    %v423 = vadd.f32 %v419, %v422
    %vm424 = vweird.f32 %v418
    %vm425 = vweird.f32 %v419
    %vm426 = vmor %vm424, %vm425
    %v427 = vsel %vm426, %v419, %v423
    %v428 = vand.u32 2147483647, %v418
    %vm429 = vcmp.eq.f32.partialorder %v428, 8.507059e+37
    %v430 = vand.u32 %v418, 2147483648
    %v431 = vor.u32 1.1754944e-38, %v430
    %v432 = vsel %vm429, %v431, %v427
    %v433 = vmul.f32 1.0, %v432
    %v434 = vmul.f32 %v433, 2.0
    %v435 = vsub.f32 %v434, 1.0
    %v436 = vmul.f32 %v433, %v377
    %438 = vrot.lane.b32.xlu0 %v435, 64
    %v439 = vpop.permute.xlu0 %438
    %v441 = vmul.f32 %v433, %v439
    %443 = vrot.lane.b32.xlu0 %v441, 32
    %v444 = vpop.permute.xlu0 %443
    %v446 = vadd.f32 %v436, %v444
    %v447 = vtanh.pop %v446
    %449 = vrot.lane.b32.xlu0 %v447, 64
    %v450 = vpop.permute.xlu0 %449
    %v452 = vmul.f32 %v433, %v450
    %454 = vrot.lane.b32.xlu0 %v452, 32
    %v455 = vpop.permute.xlu0 %454
    %s457 = scalar_lea.vmem [#allocation3], 8
    %458 = vst.msk [vmem:[%s457] sm:$0xf] %vm319, %v455
    %s459 = scalar_lea.vmem [#allocation2], 12
    %v460 = vld [vmem:[%s459] sm:$0xf]
    %v461 = vsel %vm252, %v455, 0
    %463 = vmatpush.msra.mxu0 0.0
    %464 = vmatpush.msra.mxu0 0.0
    %465 = vmatpush.msra.mxu0 0.0
    %466 = vmatpush.msra.mxu0 0.0
    %467 = vmatpush.msra.mxu0 0.0
    %468 = vmatpush.msra.mxu0 0.0
    %469 = vmatpush.msra.mxu0 0.0
    %470 = vmatpush.msra.mxu0 0.0
    %471 = vmatpush.msra.mxu0 0.0
    %472 = vmatpush.msra.mxu0 0.0
    %473 = vmatpush.msra.mxu0 0.0
    %474 = vmatpush.msra.mxu0 0.0
    %475 = vmatpush.msra.mxu0 %v250
    %476 = vmatpush.msra.mxu0 %v249
    %477 = vmatpush.msra.mxu0 %v248
    %478 = vmatpush.msra.mxu0 %v247
    %479 = vmatmul.f32.gmra.mxu0 %v461
    %v480 = vpop.f32.mrf.mxu0
    %v481 = vadd.f32 0.0, %v480
    %482 = vdwg.mxu0
    %v483 = vadd.f32 %v460, %v481
    %v484 = vxor.u32 %v483, 2147483648
    %v485 = vmul.f32 %v484, 1.442695
    %v486 = vpow.pop %v485
    %v487 = vadd.f32 %v486, 1.0
    %v488 = vrcp.pop %v487
    %v489 = vmul.f32 %v487, %v488
    %v490 = vsub.f32 1.0, %v489
    %v491 = vmul.f32 %v488, %v490
    %v492 = vadd.f32 %v488, %v491
    %vm493 = vweird.f32 %v487
    %vm494 = vweird.f32 %v488
    %vm495 = vmor %vm493, %vm494
    %v496 = vsel %vm495, %v488, %v492
    %v497 = vand.u32 2147483647, %v487
    %vm498 = vcmp.eq.f32.partialorder %v497, 8.507059e+37
    %v499 = vand.u32 %v487, 2147483648
    %v500 = vor.u32 1.1754944e-38, %v499
    %v501 = vsel %vm498, %v500, %v496
    %v502 = vmul.f32 1.0, %v501
    %v503 = vmul.f32 %v502, 2.0
    %v504 = vsub.f32 %v503, 1.0
    %v505 = vmul.f32 %v502, %v446
    %507 = vrot.lane.b32.xlu0 %v504, 64
    %v508 = vpop.permute.xlu0 %507
    %v510 = vmul.f32 %v502, %v508
    %512 = vrot.lane.b32.xlu0 %v510, 32
    %v513 = vpop.permute.xlu0 %512
    %v515 = vadd.f32 %v505, %v513
    %v516 = vtanh.pop %v515
    %518 = vrot.lane.b32.xlu0 %v516, 64
    %v519 = vpop.permute.xlu0 %518
    %v521 = vmul.f32 %v502, %v519
    %523 = vrot.lane.b32.xlu0 %v521, 32
    %v524 = vpop.permute.xlu0 %523
    %s526 = scalar_lea.vmem [#allocation3], 12
    %527 = vst.msk [vmem:[%s526] sm:$0xf] %vm319, %v524
    %s528 = scalar_lea.vmem [#allocation2], 16
    %v529 = vld [vmem:[%s528] sm:$0xf]
    %v530 = vsel %vm252, %v524, 0
    %532 = vmatpush.msra.mxu0 0.0
    %533 = vmatpush.msra.mxu0 0.0
    %534 = vmatpush.msra.mxu0 0.0
    %535 = vmatpush.msra.mxu0 0.0
    %536 = vmatpush.msra.mxu0 0.0
    %537 = vmatpush.msra.mxu0 0.0
    %538 = vmatpush.msra.mxu0 0.0
    %539 = vmatpush.msra.mxu0 0.0
    %540 = vmatpush.msra.mxu0 0.0
    %541 = vmatpush.msra.mxu0 0.0
    %542 = vmatpush.msra.mxu0 0.0
    %543 = vmatpush.msra.mxu0 0.0
    %544 = vmatpush.msra.mxu0 %v250
    %545 = vmatpush.msra.mxu0 %v249
    %546 = vmatpush.msra.mxu0 %v248
    %547 = vmatpush.msra.mxu0 %v247
    %548 = vmatmul.f32.gmra.mxu0 %v530
    %v549 = vpop.f32.mrf.mxu0
    %v550 = vadd.f32 0.0, %v549
    %551 = vdwg.mxu0
    %v552 = vadd.f32 %v529, %v550
    %v553 = vxor.u32 %v552, 2147483648
    %v554 = vmul.f32 %v553, 1.442695
    %v555 = vpow.pop %v554
    %v556 = vadd.f32 %v555, 1.0
    %v557 = vrcp.pop %v556
    %v558 = vmul.f32 %v556, %v557
    %v559 = vsub.f32 1.0, %v558
    %v560 = vmul.f32 %v557, %v559
    %v561 = vadd.f32 %v557, %v560
    %vm562 = vweird.f32 %v556
    %vm563 = vweird.f32 %v557
    %vm564 = vmor %vm562, %vm563
    %v565 = vsel %vm564, %v557, %v561
    %v566 = vand.u32 2147483647, %v556
    %vm567 = vcmp.eq.f32.partialorder %v566, 8.507059e+37
    %v568 = vand.u32 %v556, 2147483648
    %v569 = vor.u32 1.1754944e-38, %v568
    %v570 = vsel %vm567, %v569, %v565
    %v571 = vmul.f32 1.0, %v570
    %v572 = vmul.f32 %v571, 2.0
    %v573 = vsub.f32 %v572, 1.0
    %v574 = vmul.f32 %v571, %v515
    %576 = vrot.lane.b32.xlu0 %v573, 64
    %v577 = vpop.permute.xlu0 %576
    %v579 = vmul.f32 %v571, %v577
    %581 = vrot.lane.b32.xlu0 %v579, 32
    %v582 = vpop.permute.xlu0 %581
    %v584 = vadd.f32 %v574, %v582
    %v585 = vtanh.pop %v584
    %587 = vrot.lane.b32.xlu0 %v585, 64
    %v588 = vpop.permute.xlu0 %587
    %v590 = vmul.f32 %v571, %v588
    %592 = vrot.lane.b32.xlu0 %v590, 32
    %v593 = vpop.permute.xlu0 %592
    %s595 = scalar_lea.vmem [#allocation3], 16
    %596 = vst.msk [vmem:[%s595] sm:$0xf] %vm319, %v593
    %s597 = scalar_lea.vmem [#allocation2], 20
    %v598 = vld [vmem:[%s597] sm:$0xf]
    %v599 = vsel %vm252, %v593, 0
    %601 = vmatpush.msra.mxu0 0.0
    %602 = vmatpush.msra.mxu0 0.0
    %603 = vmatpush.msra.mxu0 0.0
    %604 = vmatpush.msra.mxu0 0.0
    %605 = vmatpush.msra.mxu0 0.0
    %606 = vmatpush.msra.mxu0 0.0
    %607 = vmatpush.msra.mxu0 0.0
    %608 = vmatpush.msra.mxu0 0.0
    %609 = vmatpush.msra.mxu0 0.0
    %610 = vmatpush.msra.mxu0 0.0
    %611 = vmatpush.msra.mxu0 0.0
    %612 = vmatpush.msra.mxu0 0.0
    %613 = vmatpush.msra.mxu0 %v250
    %614 = vmatpush.msra.mxu0 %v249
    %615 = vmatpush.msra.mxu0 %v248
    %616 = vmatpush.msra.mxu0 %v247
    %617 = vmatmul.f32.gmra.mxu0 %v599
    %v618 = vpop.f32.mrf.mxu0
    %v619 = vadd.f32 0.0, %v618
    %620 = vdwg.mxu0
    %v621 = vadd.f32 %v598, %v619
    %v622 = vxor.u32 %v621, 2147483648
    %v623 = vmul.f32 %v622, 1.442695
    %v624 = vpow.pop %v623
    %v625 = vadd.f32 %v624, 1.0
    %v626 = vrcp.pop %v625
    %v627 = vmul.f32 %v625, %v626
    %v628 = vsub.f32 1.0, %v627
    %v629 = vmul.f32 %v626, %v628
    %v630 = vadd.f32 %v626, %v629
    %vm631 = vweird.f32 %v625
    %vm632 = vweird.f32 %v626
    %vm633 = vmor %vm631, %vm632
    %v634 = vsel %vm633, %v626, %v630
    %v635 = vand.u32 2147483647, %v625
    %vm636 = vcmp.eq.f32.partialorder %v635, 8.507059e+37
    %v637 = vand.u32 %v625, 2147483648
    %v638 = vor.u32 1.1754944e-38, %v637
    %v639 = vsel %vm636, %v638, %v634
    %v640 = vmul.f32 1.0, %v639
    %v641 = vmul.f32 %v640, 2.0
    %v642 = vsub.f32 %v641, 1.0
    %v643 = vmul.f32 %v640, %v584
    %645 = vrot.lane.b32.xlu0 %v642, 64
    %v646 = vpop.permute.xlu0 %645
    %v648 = vmul.f32 %v640, %v646
    %650 = vrot.lane.b32.xlu0 %v648, 32
    %v651 = vpop.permute.xlu0 %650
    %v653 = vadd.f32 %v643, %v651
    %v654 = vtanh.pop %v653
    %656 = vrot.lane.b32.xlu0 %v654, 64
    %v657 = vpop.permute.xlu0 %656
    %v659 = vmul.f32 %v640, %v657
    %661 = vrot.lane.b32.xlu0 %v659, 32
    %v662 = vpop.permute.xlu0 %661
    %s664 = scalar_lea.vmem [#allocation3], 20
    %665 = vst.msk [vmem:[%s664] sm:$0xf] %vm319, %v662
    %s666 = scalar_lea.vmem [#allocation2], 24
    %v667 = vld [vmem:[%s666] sm:$0xf]
    %v668 = vsel %vm252, %v662, 0
    %670 = vmatpush.msra.mxu0 0.0
    %671 = vmatpush.msra.mxu0 0.0
    %672 = vmatpush.msra.mxu0 0.0
    %673 = vmatpush.msra.mxu0 0.0
    %674 = vmatpush.msra.mxu0 0.0
    %675 = vmatpush.msra.mxu0 0.0
    %676 = vmatpush.msra.mxu0 0.0
    %677 = vmatpush.msra.mxu0 0.0
    %678 = vmatpush.msra.mxu0 0.0
    %679 = vmatpush.msra.mxu0 0.0
    %680 = vmatpush.msra.mxu0 0.0
    %681 = vmatpush.msra.mxu0 0.0
    %682 = vmatpush.msra.mxu0 %v250
    %683 = vmatpush.msra.mxu0 %v249
    %684 = vmatpush.msra.mxu0 %v248
    %685 = vmatpush.msra.mxu0 %v247
    %686 = vmatmul.f32.gmra.mxu0 %v668
    %v687 = vpop.f32.mrf.mxu0
    %v688 = vadd.f32 0.0, %v687
    %689 = vdwg.mxu0
    %v690 = vadd.f32 %v667, %v688
    %v691 = vxor.u32 %v690, 2147483648
    %v692 = vmul.f32 %v691, 1.442695
    %v693 = vpow.pop %v692
    %v694 = vadd.f32 %v693, 1.0
    %v695 = vrcp.pop %v694
    %v696 = vmul.f32 %v694, %v695
    %v697 = vsub.f32 1.0, %v696
    %v698 = vmul.f32 %v695, %v697
    %v699 = vadd.f32 %v695, %v698
    %vm700 = vweird.f32 %v694
    %vm701 = vweird.f32 %v695
    %vm702 = vmor %vm700, %vm701
    %v703 = vsel %vm702, %v695, %v699
    %v704 = vand.u32 2147483647, %v694
    %vm705 = vcmp.eq.f32.partialorder %v704, 8.507059e+37
    %v706 = vand.u32 %v694, 2147483648
    %v707 = vor.u32 1.1754944e-38, %v706
    %v708 = vsel %vm705, %v707, %v703
    %v709 = vmul.f32 1.0, %v708
    %v710 = vmul.f32 %v709, 2.0
    %v711 = vsub.f32 %v710, 1.0
    %v712 = vmul.f32 %v709, %v653
    %714 = vrot.lane.b32.xlu0 %v711, 64
    %v715 = vpop.permute.xlu0 %714
    %v717 = vmul.f32 %v709, %v715
    %719 = vrot.lane.b32.xlu0 %v717, 32
    %v720 = vpop.permute.xlu0 %719
    %v722 = vadd.f32 %v712, %v720
    %v723 = vtanh.pop %v722
    %725 = vrot.lane.b32.xlu0 %v723, 64
    %v726 = vpop.permute.xlu0 %725
    %v728 = vmul.f32 %v709, %v726
    %730 = vrot.lane.b32.xlu0 %v728, 32
    %v731 = vpop.permute.xlu0 %730
    %s733 = scalar_lea.vmem [#allocation3], 24
    %734 = vst.msk [vmem:[%s733] sm:$0xf] %vm319, %v731
    %s735 = scalar_lea.vmem [#allocation2], 28
    %v736 = vld [vmem:[%s735] sm:$0xf]
    %v737 = vsel %vm252, %v731, 0
    %739 = vmatpush.msra.mxu0 0.0
    %740 = vmatpush.msra.mxu0 0.0
    %741 = vmatpush.msra.mxu0 0.0
    %742 = vmatpush.msra.mxu0 0.0
    %743 = vmatpush.msra.mxu0 0.0
    %744 = vmatpush.msra.mxu0 0.0
    %745 = vmatpush.msra.mxu0 0.0
    %746 = vmatpush.msra.mxu0 0.0
    %747 = vmatpush.msra.mxu0 0.0
    %748 = vmatpush.msra.mxu0 0.0
    %749 = vmatpush.msra.mxu0 0.0
    %750 = vmatpush.msra.mxu0 0.0
    %751 = vmatpush.msra.mxu0 %v250
    %752 = vmatpush.msra.mxu0 %v249
    %753 = vmatpush.msra.mxu0 %v248
    %754 = vmatpush.msra.mxu0 %v247
    %755 = vmatmul.f32.gmra.mxu0 %v737
    %v756 = vpop.f32.mrf.mxu0
    %v757 = vadd.f32 0.0, %v756
    %758 = vdwg.mxu0
    %v759 = vadd.f32 %v736, %v757
    %v760 = vxor.u32 %v759, 2147483648
    %v761 = vmul.f32 %v760, 1.442695
    %v762 = vpow.pop %v761
    %v763 = vadd.f32 %v762, 1.0
    %v764 = vrcp.pop %v763
    %v765 = vmul.f32 %v763, %v764
    %v766 = vsub.f32 1.0, %v765
    %v767 = vmul.f32 %v764, %v766
    %v768 = vadd.f32 %v764, %v767
    %vm769 = vweird.f32 %v763
    %vm770 = vweird.f32 %v764
    %vm771 = vmor %vm769, %vm770
    %v772 = vsel %vm771, %v764, %v768
    %v773 = vand.u32 2147483647, %v763
    %vm774 = vcmp.eq.f32.partialorder %v773, 8.507059e+37
    %v775 = vand.u32 %v763, 2147483648
    %v776 = vor.u32 1.1754944e-38, %v775
    %v777 = vsel %vm774, %v776, %v772
    %v778 = vmul.f32 1.0, %v777
    %v779 = vmul.f32 %v778, 2.0
    %v780 = vsub.f32 %v779, 1.0
    %v781 = vmul.f32 %v778, %v722
    %783 = vrot.lane.b32.xlu0 %v780, 64
    %v784 = vpop.permute.xlu0 %783
    %v786 = vmul.f32 %v778, %v784
    %788 = vrot.lane.b32.xlu0 %v786, 32
    %v789 = vpop.permute.xlu0 %788
    %v791 = vadd.f32 %v781, %v789
    %v792 = vtanh.pop %v791
    %794 = vrot.lane.b32.xlu0 %v792, 64
    %v795 = vpop.permute.xlu0 %794
    %v797 = vmul.f32 %v778, %v795
    %799 = vrot.lane.b32.xlu0 %v797, 32
    %v800 = vpop.permute.xlu0 %799
    %s802 = scalar_lea.vmem [#allocation3], 28
    %803 = vst.msk [vmem:[%s802] sm:$0xf] %vm319, %v800
    %v804 = vld [vmem:[#allocation3] sm:$0xf]
    %v805 = vld [vmem:[#allocation3 + $0x4] sm:$0xf]
    %v806 = vld [vmem:[#allocation3 + $0x8] sm:$0xf]
    %v807 = vld [vmem:[#allocation3 + $0xc] sm:$0xf]
    %v808 = vld [vmem:[#allocation3 + $0x10] sm:$0xf]
    %v809 = vld [vmem:[#allocation3 + $0x14] sm:$0xf]
    %v810 = vld [vmem:[#allocation3 + $0x18] sm:$0xf]
    %v811 = vld [vmem:[#allocation3 + $0x1c] sm:$0xf]
    %v812 = vld [vmem:[#allocation10] sm:$0xff]
    %v813 = vld [vmem:[#allocation10 + $0x8] sm:$0xff]
    %v814 = vld [vmem:[#allocation10 + $0x10] sm:$0xff]
    %v815 = vld [vmem:[#allocation10 + $0x18] sm:$0xff]
    %v816 = vld [vmem:[%s6] sm:$0x1]
    %v818 = vperm.slane %v816, 0
    %828 = vst [vmem:[#allocation1] ss:$2 sm:$0xff] %v804
    %s829 = scalar_lea.vmem [#allocation1], 1
    %830 = vst [vmem:[%s829] ss:$2 sm:$0xff] %v805
    %s831 = scalar_lea.vmem [#allocation1], 16
    %832 = vst [vmem:[%s831] ss:$2 sm:$0xff] %v806
    %s833 = scalar_lea.vmem [#allocation1], 17
    %834 = vst [vmem:[%s833] ss:$2 sm:$0xff] %v807
    %s835 = scalar_lea.vmem [#allocation1], 32
    %836 = vst [vmem:[%s835] ss:$2 sm:$0xff] %v808
    %s837 = scalar_lea.vmem [#allocation1], 33
    %838 = vst [vmem:[%s837] ss:$2 sm:$0xff] %v809
    %s839 = scalar_lea.vmem [#allocation1], 48
    %840 = vst [vmem:[%s839] ss:$2 sm:$0xff] %v810
    %s841 = scalar_lea.vmem [#allocation1], 49
    %842 = vst [vmem:[%s841] ss:$2 sm:$0xff] %v811
    %v843 = vld.sshfl [vmem:[#allocation1] sm:$0xff pattern:$0x75316420]
    %v844 = vld.sshfl [vmem:[#allocation1 + $0x10] sm:$0xff pattern:$0x75316420]
    %v845 = vld.sshfl [vmem:[#allocation1 + $0x20] sm:$0xff pattern:$0x75316420]
    %v846 = vld.sshfl [vmem:[#allocation1 + $0x30] sm:$0xff pattern:$0x75316420]
    %v847 = vsel %vm252, %v843, 0
    %v849 = vsel %vm252, %v844, 0
    %v851 = vsel %vm252, %v845, 0
    %v853 = vsel %vm252, %v846, 0
    %855 = vmatpush.msra.mxu0 0.0
    %856 = vmatpush.msra.mxu0 0.0
    %857 = vmatpush.msra.mxu0 0.0
    %858 = vmatpush.msra.mxu0 0.0
    %859 = vmatpush.msra.mxu0 0.0
    %860 = vmatpush.msra.mxu0 0.0
    %861 = vmatpush.msra.mxu0 0.0
    %862 = vmatpush.msra.mxu0 0.0
    %863 = vmatpush.msra.mxu0 0.0
    %864 = vmatpush.msra.mxu0 0.0
    %865 = vmatpush.msra.mxu0 0.0
    %866 = vmatpush.msra.mxu0 0.0
    %867 = vmatpush.msra.mxu0 %v815
    %868 = vmatpush.msra.mxu0 %v814
    %869 = vmatpush.msra.mxu0 %v813
    %870 = vmatpush.msra.mxu0 %v812
    %871 = vmatmul.f32.gmra.mxu0 %v847
    %v872 = vpop.f32.mrf.mxu0
    %v873 = vadd.f32 %v818, %v872
    %874 = vmatmul.f32.gmra.mxu0 %v849
    %v875 = vpop.f32.mrf.mxu0
    %v876 = vadd.f32 %v818, %v875
    %877 = vmatmul.f32.gmra.mxu0 %v851
    %v878 = vpop.f32.mrf.mxu0
    %v879 = vadd.f32 %v818, %v878
    %880 = vmatmul.f32.gmra.mxu0 %v853
    %v881 = vpop.f32.mrf.mxu0
    %v882 = vadd.f32 %v818, %v881
    %883 = vdwg.mxu0
    %v888 = vrot.slane %v873, 4
    %v889 = vrot.slane %v876, 4
    %v890 = vrot.slane %v879, 4
    %v891 = vrot.slane %v882, 4
    %896 = vst [vmem:[#allocation2] sm:$0xf] %v873
    %897 = vst [vmem:[#allocation2 + $0x4] sm:$0xf] %v888
    %898 = vst [vmem:[#allocation2 + $0x8] sm:$0xf] %v876
    %899 = vst [vmem:[#allocation2 + $0xc] sm:$0xf] %v889
    %900 = vst [vmem:[#allocation2 + $0x10] sm:$0xf] %v879
    %901 = vst [vmem:[#allocation2 + $0x14] sm:$0xf] %v890
    %902 = vst [vmem:[#allocation2 + $0x18] sm:$0xf] %v882
    %903 = vst [vmem:[#allocation2 + $0x1c] sm:$0xf] %v891
    %v904 = vld [vmem:[#allocation12] sm:$0xff]
    %v905 = vld [vmem:[#allocation12 + $0x8] sm:$0xff]
    %v906 = vld [vmem:[#allocation12 + $0x10] sm:$0xff]
    %v907 = vld [vmem:[#allocation12 + $0x18] sm:$0xff]
    %v908 = vld [vmem:[#allocation2] sm:$0xf]
    %909 = vmatpush.msra.mxu0 0.0
    %910 = vmatpush.msra.mxu0 0.0
    %911 = vmatpush.msra.mxu0 0.0
    %912 = vmatpush.msra.mxu0 0.0
    %913 = vmatpush.msra.mxu0 0.0
    %914 = vmatpush.msra.mxu0 0.0
    %915 = vmatpush.msra.mxu0 0.0
    %916 = vmatpush.msra.mxu0 0.0
    %917 = vmatpush.msra.mxu0 0.0
    %918 = vmatpush.msra.mxu0 0.0
    %919 = vmatpush.msra.mxu0 0.0
    %920 = vmatpush.msra.mxu0 0.0
    %921 = vmatpush.msra.mxu0 %v907
    %922 = vmatpush.msra.mxu0 %v906
    %923 = vmatpush.msra.mxu0 %v905
    %924 = vmatpush.msra.mxu0 %v904
    %925 = vmatmul.f32.gmra.mxu0 %v254
    %v926 = vpop.f32.mrf.mxu0
    %v927 = vadd.f32 0.0, %v926
    %928 = vdwg.mxu0
    %v929 = vadd.f32 %v908, %v927
    %v930 = vxor.u32 %v929, 2147483648
    %v931 = vmul.f32 %v930, 1.442695
    %v932 = vpow.pop %v931
    %v933 = vadd.f32 %v932, 1.0
    %v934 = vrcp.pop %v933
    %v935 = vmul.f32 %v933, %v934
    %v936 = vsub.f32 1.0, %v935
    %v937 = vmul.f32 %v934, %v936
    %v938 = vadd.f32 %v934, %v937
    %vm939 = vweird.f32 %v933
    %vm940 = vweird.f32 %v934
    %vm941 = vmor %vm939, %vm940
    %v942 = vsel %vm941, %v934, %v938
    %v943 = vand.u32 2147483647, %v933
    %vm944 = vcmp.eq.f32.partialorder %v943, 8.507059e+37
    %v945 = vand.u32 %v933, 2147483648
    %v946 = vor.u32 1.1754944e-38, %v945
    %v947 = vsel %vm944, %v946, %v942
    %v948 = vmul.f32 1.0, %v947
    %v949 = vmul.f32 %v948, 2.0
    %v950 = vsub.f32 %v949, 1.0
    %v951 = vmul.f32 %v948, 0.0
    %953 = vrot.lane.b32.xlu0 %v950, 64
    %v954 = vpop.permute.xlu0 %953
    %v956 = vmul.f32 %v948, %v954
    %958 = vrot.lane.b32.xlu0 %v956, 32
    %v959 = vpop.permute.xlu0 %958
    %v961 = vadd.f32 %v951, %v959
    %v962 = vtanh.pop %v961
    %964 = vrot.lane.b32.xlu0 %v962, 64
    %v965 = vpop.permute.xlu0 %964
    %v967 = vmul.f32 %v948, %v965
    %969 = vrot.lane.b32.xlu0 %v967, 32
    %v970 = vpop.permute.xlu0 %969
    %972 = vst.msk [vmem:[#allocation3] sm:$0xf] %vm319, %v970
    %v973 = vld [vmem:[%s321] sm:$0xf]
    %v974 = vsel %vm252, %v970, 0
    %976 = vmatpush.msra.mxu0 0.0
    %977 = vmatpush.msra.mxu0 0.0
    %978 = vmatpush.msra.mxu0 0.0
    %979 = vmatpush.msra.mxu0 0.0
    %980 = vmatpush.msra.mxu0 0.0
    %981 = vmatpush.msra.mxu0 0.0
    %982 = vmatpush.msra.mxu0 0.0
    %983 = vmatpush.msra.mxu0 0.0
    %984 = vmatpush.msra.mxu0 0.0
    %985 = vmatpush.msra.mxu0 0.0
    %986 = vmatpush.msra.mxu0 0.0
    %987 = vmatpush.msra.mxu0 0.0
    %988 = vmatpush.msra.mxu0 %v907
    %989 = vmatpush.msra.mxu0 %v906
    %990 = vmatpush.msra.mxu0 %v905
    %991 = vmatpush.msra.mxu0 %v904
    %992 = vmatmul.f32.gmra.mxu0 %v974
    %v993 = vpop.f32.mrf.mxu0
    %v994 = vadd.f32 0.0, %v993
    %995 = vdwg.mxu0
    %v996 = vadd.f32 %v973, %v994
    %v997 = vxor.u32 %v996, 2147483648
    %v998 = vmul.f32 %v997, 1.442695
    %v999 = vpow.pop %v998
    %v1000 = vadd.f32 %v999, 1.0
    %v1001 = vrcp.pop %v1000
    %v1002 = vmul.f32 %v1000, %v1001
    %v1003 = vsub.f32 1.0, %v1002
    %v1004 = vmul.f32 %v1001, %v1003
    %v1005 = vadd.f32 %v1001, %v1004
    %vm1006 = vweird.f32 %v1000
    %vm1007 = vweird.f32 %v1001
    %vm1008 = vmor %vm1006, %vm1007
    %v1009 = vsel %vm1008, %v1001, %v1005
    %v1010 = vand.u32 2147483647, %v1000
    %vm1011 = vcmp.eq.f32.partialorder %v1010, 8.507059e+37
    %v1012 = vand.u32 %v1000, 2147483648
    %v1013 = vor.u32 1.1754944e-38, %v1012
    %v1014 = vsel %vm1011, %v1013, %v1009
    %v1015 = vmul.f32 1.0, %v1014
    %v1016 = vmul.f32 %v1015, 2.0
    %v1017 = vsub.f32 %v1016, 1.0
    %v1018 = vmul.f32 %v1015, %v961
    %1020 = vrot.lane.b32.xlu0 %v1017, 64
    %v1021 = vpop.permute.xlu0 %1020
    %v1023 = vmul.f32 %v1015, %v1021
    %1025 = vrot.lane.b32.xlu0 %v1023, 32
    %v1026 = vpop.permute.xlu0 %1025
    %v1028 = vadd.f32 %v1018, %v1026
    %v1029 = vtanh.pop %v1028
    %1031 = vrot.lane.b32.xlu0 %v1029, 64
    %v1032 = vpop.permute.xlu0 %1031
    %v1034 = vmul.f32 %v1015, %v1032
    %1036 = vrot.lane.b32.xlu0 %v1034, 32
    %v1037 = vpop.permute.xlu0 %1036
    %1039 = vst.msk [vmem:[%s388] sm:$0xf] %vm319, %v1037
    %v1040 = vld [vmem:[%s390] sm:$0xf]
    %v1041 = vsel %vm252, %v1037, 0
    %1043 = vmatpush.msra.mxu0 0.0
    %1044 = vmatpush.msra.mxu0 0.0
    %1045 = vmatpush.msra.mxu0 0.0
    %1046 = vmatpush.msra.mxu0 0.0
    %1047 = vmatpush.msra.mxu0 0.0
    %1048 = vmatpush.msra.mxu0 0.0
    %1049 = vmatpush.msra.mxu0 0.0
    %1050 = vmatpush.msra.mxu0 0.0
    %1051 = vmatpush.msra.mxu0 0.0
    %1052 = vmatpush.msra.mxu0 0.0
    %1053 = vmatpush.msra.mxu0 0.0
    %1054 = vmatpush.msra.mxu0 0.0
    %1055 = vmatpush.msra.mxu0 %v907
    %1056 = vmatpush.msra.mxu0 %v906
    %1057 = vmatpush.msra.mxu0 %v905
    %1058 = vmatpush.msra.mxu0 %v904
    %1059 = vmatmul.f32.gmra.mxu0 %v1041
    %v1060 = vpop.f32.mrf.mxu0
    %v1061 = vadd.f32 0.0, %v1060
    %1062 = vdwg.mxu0
    %v1063 = vadd.f32 %v1040, %v1061
    %v1064 = vxor.u32 %v1063, 2147483648
    %v1065 = vmul.f32 %v1064, 1.442695
    %v1066 = vpow.pop %v1065
    %v1067 = vadd.f32 %v1066, 1.0
    %v1068 = vrcp.pop %v1067
    %v1069 = vmul.f32 %v1067, %v1068
    %v1070 = vsub.f32 1.0, %v1069
    %v1071 = vmul.f32 %v1068, %v1070
    %v1072 = vadd.f32 %v1068, %v1071
    %vm1073 = vweird.f32 %v1067
    %vm1074 = vweird.f32 %v1068
    %vm1075 = vmor %vm1073, %vm1074
    %v1076 = vsel %vm1075, %v1068, %v1072
    %v1077 = vand.u32 2147483647, %v1067
    %vm1078 = vcmp.eq.f32.partialorder %v1077, 8.507059e+37
    %v1079 = vand.u32 %v1067, 2147483648
    %v1080 = vor.u32 1.1754944e-38, %v1079
    %v1081 = vsel %vm1078, %v1080, %v1076
    %v1082 = vmul.f32 1.0, %v1081
    %v1083 = vmul.f32 %v1082, 2.0
    %v1084 = vsub.f32 %v1083, 1.0
    %v1085 = vmul.f32 %v1082, %v1028
    %1087 = vrot.lane.b32.xlu0 %v1084, 64
    %v1088 = vpop.permute.xlu0 %1087
    %v1090 = vmul.f32 %v1082, %v1088
    %1092 = vrot.lane.b32.xlu0 %v1090, 32
    %v1093 = vpop.permute.xlu0 %1092
    %v1095 = vadd.f32 %v1085, %v1093
    %v1096 = vtanh.pop %v1095
    %1098 = vrot.lane.b32.xlu0 %v1096, 64
    %v1099 = vpop.permute.xlu0 %1098
    %v1101 = vmul.f32 %v1082, %v1099
    %1103 = vrot.lane.b32.xlu0 %v1101, 32
    %v1104 = vpop.permute.xlu0 %1103
    %1106 = vst.msk [vmem:[%s457] sm:$0xf] %vm319, %v1104
    %v1107 = vld [vmem:[%s459] sm:$0xf]
    %v1108 = vsel %vm252, %v1104, 0
    %1110 = vmatpush.msra.mxu0 0.0
    %1111 = vmatpush.msra.mxu0 0.0
    %1112 = vmatpush.msra.mxu0 0.0
    %1113 = vmatpush.msra.mxu0 0.0
    %1114 = vmatpush.msra.mxu0 0.0
    %1115 = vmatpush.msra.mxu0 0.0
    %1116 = vmatpush.msra.mxu0 0.0
    %1117 = vmatpush.msra.mxu0 0.0
    %1118 = vmatpush.msra.mxu0 0.0
    %1119 = vmatpush.msra.mxu0 0.0
    %1120 = vmatpush.msra.mxu0 0.0
    %1121 = vmatpush.msra.mxu0 0.0
    %1122 = vmatpush.msra.mxu0 %v907
    %1123 = vmatpush.msra.mxu0 %v906
    %1124 = vmatpush.msra.mxu0 %v905
    %1125 = vmatpush.msra.mxu0 %v904
    %1126 = vmatmul.f32.gmra.mxu0 %v1108
    %v1127 = vpop.f32.mrf.mxu0
    %v1128 = vadd.f32 0.0, %v1127
    %1129 = vdwg.mxu0
    %v1130 = vadd.f32 %v1107, %v1128
    %v1131 = vxor.u32 %v1130, 2147483648
    %v1132 = vmul.f32 %v1131, 1.442695
    %v1133 = vpow.pop %v1132
    %v1134 = vadd.f32 %v1133, 1.0
    %v1135 = vrcp.pop %v1134
    %v1136 = vmul.f32 %v1134, %v1135
    %v1137 = vsub.f32 1.0, %v1136
    %v1138 = vmul.f32 %v1135, %v1137
    %v1139 = vadd.f32 %v1135, %v1138
    %vm1140 = vweird.f32 %v1134
    %vm1141 = vweird.f32 %v1135
    %vm1142 = vmor %vm1140, %vm1141
    %v1143 = vsel %vm1142, %v1135, %v1139
    %v1144 = vand.u32 2147483647, %v1134
    %vm1145 = vcmp.eq.f32.partialorder %v1144, 8.507059e+37
    %v1146 = vand.u32 %v1134, 2147483648
    %v1147 = vor.u32 1.1754944e-38, %v1146
    %v1148 = vsel %vm1145, %v1147, %v1143
    %v1149 = vmul.f32 1.0, %v1148
    %v1150 = vmul.f32 %v1149, 2.0
    %v1151 = vsub.f32 %v1150, 1.0
    %v1152 = vmul.f32 %v1149, %v1095
    %1154 = vrot.lane.b32.xlu0 %v1151, 64
    %v1155 = vpop.permute.xlu0 %1154
    %v1157 = vmul.f32 %v1149, %v1155
    %1159 = vrot.lane.b32.xlu0 %v1157, 32
    %v1160 = vpop.permute.xlu0 %1159
    %v1162 = vadd.f32 %v1152, %v1160
    %v1163 = vtanh.pop %v1162
    %1165 = vrot.lane.b32.xlu0 %v1163, 64
    %v1166 = vpop.permute.xlu0 %1165
    %v1168 = vmul.f32 %v1149, %v1166
    %1170 = vrot.lane.b32.xlu0 %v1168, 32
    %v1171 = vpop.permute.xlu0 %1170
    %1173 = vst.msk [vmem:[%s526] sm:$0xf] %vm319, %v1171
    %v1174 = vld [vmem:[%s528] sm:$0xf]
    %v1175 = vsel %vm252, %v1171, 0
    %1177 = vmatpush.msra.mxu0 0.0
    %1178 = vmatpush.msra.mxu0 0.0
    %1179 = vmatpush.msra.mxu0 0.0
    %1180 = vmatpush.msra.mxu0 0.0
    %1181 = vmatpush.msra.mxu0 0.0
    %1182 = vmatpush.msra.mxu0 0.0
    %1183 = vmatpush.msra.mxu0 0.0
    %1184 = vmatpush.msra.mxu0 0.0
    %1185 = vmatpush.msra.mxu0 0.0
    %1186 = vmatpush.msra.mxu0 0.0
    %1187 = vmatpush.msra.mxu0 0.0
    %1188 = vmatpush.msra.mxu0 0.0
    %1189 = vmatpush.msra.mxu0 %v907
    %1190 = vmatpush.msra.mxu0 %v906
    %1191 = vmatpush.msra.mxu0 %v905
    %1192 = vmatpush.msra.mxu0 %v904
    %1193 = vmatmul.f32.gmra.mxu0 %v1175
    %v1194 = vpop.f32.mrf.mxu0
    %v1195 = vadd.f32 0.0, %v1194
    %1196 = vdwg.mxu0
    %v1197 = vadd.f32 %v1174, %v1195
    %v1198 = vxor.u32 %v1197, 2147483648
    %v1199 = vmul.f32 %v1198, 1.442695
    %v1200 = vpow.pop %v1199
    %v1201 = vadd.f32 %v1200, 1.0
    %v1202 = vrcp.pop %v1201
    %v1203 = vmul.f32 %v1201, %v1202
    %v1204 = vsub.f32 1.0, %v1203
    %v1205 = vmul.f32 %v1202, %v1204
    %v1206 = vadd.f32 %v1202, %v1205
    %vm1207 = vweird.f32 %v1201
    %vm1208 = vweird.f32 %v1202
    %vm1209 = vmor %vm1207, %vm1208
    %v1210 = vsel %vm1209, %v1202, %v1206
    %v1211 = vand.u32 2147483647, %v1201
    %vm1212 = vcmp.eq.f32.partialorder %v1211, 8.507059e+37
    %v1213 = vand.u32 %v1201, 2147483648
    %v1214 = vor.u32 1.1754944e-38, %v1213
    %v1215 = vsel %vm1212, %v1214, %v1210
    %v1216 = vmul.f32 1.0, %v1215
    %v1217 = vmul.f32 %v1216, 2.0
    %v1218 = vsub.f32 %v1217, 1.0
    %v1219 = vmul.f32 %v1216, %v1162
    %1221 = vrot.lane.b32.xlu0 %v1218, 64
    %v1222 = vpop.permute.xlu0 %1221
    %v1224 = vmul.f32 %v1216, %v1222
    %1226 = vrot.lane.b32.xlu0 %v1224, 32
    %v1227 = vpop.permute.xlu0 %1226
    %v1229 = vadd.f32 %v1219, %v1227
    %v1230 = vtanh.pop %v1229
    %1232 = vrot.lane.b32.xlu0 %v1230, 64
    %v1233 = vpop.permute.xlu0 %1232
    %v1235 = vmul.f32 %v1216, %v1233
    %1237 = vrot.lane.b32.xlu0 %v1235, 32
    %v1238 = vpop.permute.xlu0 %1237
    %1240 = vst.msk [vmem:[%s595] sm:$0xf] %vm319, %v1238
    %v1241 = vld [vmem:[%s597] sm:$0xf]
    %v1242 = vsel %vm252, %v1238, 0
    %1244 = vmatpush.msra.mxu0 0.0
    %1245 = vmatpush.msra.mxu0 0.0
    %1246 = vmatpush.msra.mxu0 0.0
    %1247 = vmatpush.msra.mxu0 0.0
    %1248 = vmatpush.msra.mxu0 0.0
    %1249 = vmatpush.msra.mxu0 0.0
    %1250 = vmatpush.msra.mxu0 0.0
    %1251 = vmatpush.msra.mxu0 0.0
    %1252 = vmatpush.msra.mxu0 0.0
    %1253 = vmatpush.msra.mxu0 0.0
    %1254 = vmatpush.msra.mxu0 0.0
    %1255 = vmatpush.msra.mxu0 0.0
    %1256 = vmatpush.msra.mxu0 %v907
    %1257 = vmatpush.msra.mxu0 %v906
    %1258 = vmatpush.msra.mxu0 %v905
    %1259 = vmatpush.msra.mxu0 %v904
    %1260 = vmatmul.f32.gmra.mxu0 %v1242
    %v1261 = vpop.f32.mrf.mxu0
    %v1262 = vadd.f32 0.0, %v1261
    %1263 = vdwg.mxu0
    %v1264 = vadd.f32 %v1241, %v1262
    %v1265 = vxor.u32 %v1264, 2147483648
    %v1266 = vmul.f32 %v1265, 1.442695
    %v1267 = vpow.pop %v1266
    %v1268 = vadd.f32 %v1267, 1.0
    %v1269 = vrcp.pop %v1268
    %v1270 = vmul.f32 %v1268, %v1269
    %v1271 = vsub.f32 1.0, %v1270
    %v1272 = vmul.f32 %v1269, %v1271
    %v1273 = vadd.f32 %v1269, %v1272
    %vm1274 = vweird.f32 %v1268
    %vm1275 = vweird.f32 %v1269
    %vm1276 = vmor %vm1274, %vm1275
    %v1277 = vsel %vm1276, %v1269, %v1273
    %v1278 = vand.u32 2147483647, %v1268
    %vm1279 = vcmp.eq.f32.partialorder %v1278, 8.507059e+37
    %v1280 = vand.u32 %v1268, 2147483648
    %v1281 = vor.u32 1.1754944e-38, %v1280
    %v1282 = vsel %vm1279, %v1281, %v1277
    %v1283 = vmul.f32 1.0, %v1282
    %v1284 = vmul.f32 %v1283, 2.0
    %v1285 = vsub.f32 %v1284, 1.0
    %v1286 = vmul.f32 %v1283, %v1229
    %1288 = vrot.lane.b32.xlu0 %v1285, 64
    %v1289 = vpop.permute.xlu0 %1288
    %v1291 = vmul.f32 %v1283, %v1289
    %1293 = vrot.lane.b32.xlu0 %v1291, 32
    %v1294 = vpop.permute.xlu0 %1293
    %v1296 = vadd.f32 %v1286, %v1294
    %v1297 = vtanh.pop %v1296
    %1299 = vrot.lane.b32.xlu0 %v1297, 64
    %v1300 = vpop.permute.xlu0 %1299
    %v1302 = vmul.f32 %v1283, %v1300
    %1304 = vrot.lane.b32.xlu0 %v1302, 32
    %v1305 = vpop.permute.xlu0 %1304
    %1307 = vst.msk [vmem:[%s664] sm:$0xf] %vm319, %v1305
    %v1308 = vld [vmem:[%s666] sm:$0xf]
    %v1309 = vsel %vm252, %v1305, 0
    %1311 = vmatpush.msra.mxu0 0.0
    %1312 = vmatpush.msra.mxu0 0.0
    %1313 = vmatpush.msra.mxu0 0.0
    %1314 = vmatpush.msra.mxu0 0.0
    %1315 = vmatpush.msra.mxu0 0.0
    %1316 = vmatpush.msra.mxu0 0.0
    %1317 = vmatpush.msra.mxu0 0.0
    %1318 = vmatpush.msra.mxu0 0.0
    %1319 = vmatpush.msra.mxu0 0.0
    %1320 = vmatpush.msra.mxu0 0.0
    %1321 = vmatpush.msra.mxu0 0.0
    %1322 = vmatpush.msra.mxu0 0.0
    %1323 = vmatpush.msra.mxu0 %v907
    %1324 = vmatpush.msra.mxu0 %v906
    %1325 = vmatpush.msra.mxu0 %v905
    %1326 = vmatpush.msra.mxu0 %v904
    %1327 = vmatmul.f32.gmra.mxu0 %v1309
    %v1328 = vpop.f32.mrf.mxu0
    %v1329 = vadd.f32 0.0, %v1328
    %1330 = vdwg.mxu0
    %v1331 = vadd.f32 %v1308, %v1329
    %v1332 = vxor.u32 %v1331, 2147483648
    %v1333 = vmul.f32 %v1332, 1.442695
    %v1334 = vpow.pop %v1333
    %v1335 = vadd.f32 %v1334, 1.0
    %v1336 = vrcp.pop %v1335
    %v1337 = vmul.f32 %v1335, %v1336
    %v1338 = vsub.f32 1.0, %v1337
    %v1339 = vmul.f32 %v1336, %v1338
    %v1340 = vadd.f32 %v1336, %v1339
    %vm1341 = vweird.f32 %v1335
    %vm1342 = vweird.f32 %v1336
    %vm1343 = vmor %vm1341, %vm1342
    %v1344 = vsel %vm1343, %v1336, %v1340
    %v1345 = vand.u32 2147483647, %v1335
    %vm1346 = vcmp.eq.f32.partialorder %v1345, 8.507059e+37
    %v1347 = vand.u32 %v1335, 2147483648
    %v1348 = vor.u32 1.1754944e-38, %v1347
    %v1349 = vsel %vm1346, %v1348, %v1344
    %v1350 = vmul.f32 1.0, %v1349
    %v1351 = vmul.f32 %v1350, 2.0
    %v1352 = vsub.f32 %v1351, 1.0
    %v1353 = vmul.f32 %v1350, %v1296
    %1355 = vrot.lane.b32.xlu0 %v1352, 64
    %v1356 = vpop.permute.xlu0 %1355
    %v1358 = vmul.f32 %v1350, %v1356
    %1360 = vrot.lane.b32.xlu0 %v1358, 32
    %v1361 = vpop.permute.xlu0 %1360
    %v1363 = vadd.f32 %v1353, %v1361
    %v1364 = vtanh.pop %v1363
    %1366 = vrot.lane.b32.xlu0 %v1364, 64
    %v1367 = vpop.permute.xlu0 %1366
    %v1369 = vmul.f32 %v1350, %v1367
    %1371 = vrot.lane.b32.xlu0 %v1369, 32
    %v1372 = vpop.permute.xlu0 %1371
    %1374 = vst.msk [vmem:[%s733] sm:$0xf] %vm319, %v1372
    %v1375 = vld [vmem:[%s735] sm:$0xf]
    %v1376 = vsel %vm252, %v1372, 0
    %1378 = vmatpush.msra.mxu0 0.0
    %1379 = vmatpush.msra.mxu0 0.0
    %1380 = vmatpush.msra.mxu0 0.0
    %1381 = vmatpush.msra.mxu0 0.0
    %1382 = vmatpush.msra.mxu0 0.0
    %1383 = vmatpush.msra.mxu0 0.0
    %1384 = vmatpush.msra.mxu0 0.0
    %1385 = vmatpush.msra.mxu0 0.0
    %1386 = vmatpush.msra.mxu0 0.0
    %1387 = vmatpush.msra.mxu0 0.0
    %1388 = vmatpush.msra.mxu0 0.0
    %1389 = vmatpush.msra.mxu0 0.0
    %1390 = vmatpush.msra.mxu0 %v907
    %1391 = vmatpush.msra.mxu0 %v906
    %1392 = vmatpush.msra.mxu0 %v905
    %1393 = vmatpush.msra.mxu0 %v904
    %1394 = vmatmul.f32.gmra.mxu0 %v1376
    %v1395 = vpop.f32.mrf.mxu0
    %v1396 = vadd.f32 0.0, %v1395
    %1397 = vdwg.mxu0
    %v1398 = vadd.f32 %v1375, %v1396
    %v1399 = vxor.u32 %v1398, 2147483648
    %v1400 = vmul.f32 %v1399, 1.442695
    %v1401 = vpow.pop %v1400
    %v1402 = vadd.f32 %v1401, 1.0
    %v1403 = vrcp.pop %v1402
    %v1404 = vmul.f32 %v1402, %v1403
    %v1405 = vsub.f32 1.0, %v1404
    %v1406 = vmul.f32 %v1403, %v1405
    %v1407 = vadd.f32 %v1403, %v1406
    %vm1408 = vweird.f32 %v1402
    %vm1409 = vweird.f32 %v1403
    %vm1410 = vmor %vm1408, %vm1409
    %v1411 = vsel %vm1410, %v1403, %v1407
    %v1412 = vand.u32 2147483647, %v1402
    %vm1413 = vcmp.eq.f32.partialorder %v1412, 8.507059e+37
    %v1414 = vand.u32 %v1402, 2147483648
    %v1415 = vor.u32 1.1754944e-38, %v1414
    %v1416 = vsel %vm1413, %v1415, %v1411
    %v1417 = vmul.f32 1.0, %v1416
    %v1418 = vmul.f32 %v1417, 2.0
    %v1419 = vsub.f32 %v1418, 1.0
    %v1420 = vmul.f32 %v1417, %v1363
    %1422 = vrot.lane.b32.xlu0 %v1419, 64
    %v1423 = vpop.permute.xlu0 %1422
    %v1425 = vmul.f32 %v1417, %v1423
    %1427 = vrot.lane.b32.xlu0 %v1425, 32
    %v1428 = vpop.permute.xlu0 %1427
    %v1430 = vadd.f32 %v1420, %v1428
    %v1431 = vtanh.pop %v1430
    %1433 = vrot.lane.b32.xlu0 %v1431, 64
    %v1434 = vpop.permute.xlu0 %1433
    %v1436 = vmul.f32 %v1417, %v1434
    %1438 = vrot.lane.b32.xlu0 %v1436, 32
    %v1439 = vpop.permute.xlu0 %1438
    %1441 = vst.msk [vmem:[%s802] sm:$0xf] %vm319, %v1439
    %v1442 = vld [vmem:[#allocation3] sm:$0xf]
    %v1443 = vld [vmem:[#allocation3 + $0x4] sm:$0xf]
    %v1444 = vld [vmem:[#allocation3 + $0x8] sm:$0xf]
    %v1445 = vld [vmem:[#allocation3 + $0xc] sm:$0xf]
    %v1446 = vld [vmem:[#allocation3 + $0x10] sm:$0xf]
    %v1447 = vld [vmem:[#allocation3 + $0x14] sm:$0xf]
    %v1448 = vld [vmem:[#allocation3 + $0x18] sm:$0xf]
    %v1449 = vld [vmem:[#allocation3 + $0x1c] sm:$0xf]
    %v1450 = vmax.f32 %v1442, 0.0
    %v1451 = vmax.f32 %v1443, 0.0
    %v1452 = vmax.f32 %v1444, 0.0
    %v1453 = vmax.f32 %v1445, 0.0
    %v1454 = vmax.f32 %v1446, 0.0
    %v1455 = vmax.f32 %v1447, 0.0
    %v1456 = vmax.f32 %v1448, 0.0
    %v1457 = vmax.f32 %v1449, 0.0
    %v1458 = vld [vmem:[#allocation13] sm:$0xff]
    %v1459 = vld [vmem:[#allocation13 + $0x8] sm:$0xff]
    %v1460 = vld [vmem:[#allocation13 + $0x10] sm:$0xff]
    %v1461 = vld [vmem:[#allocation13 + $0x18] sm:$0xff]
    %v1462 = vld [vmem:[%s8] sm:$0x1]
    %v1464 = vperm.slane %v1462, 0
    %1474 = vst [vmem:[#allocation1] ss:$2 sm:$0xff] %v1450
    %s1475 = scalar_lea.vmem [#allocation1], 1
    %1476 = vst [vmem:[%s1475] ss:$2 sm:$0xff] %v1451
    %s1477 = scalar_lea.vmem [#allocation1], 16
    %1478 = vst [vmem:[%s1477] ss:$2 sm:$0xff] %v1452
    %s1479 = scalar_lea.vmem [#allocation1], 17
    %1480 = vst [vmem:[%s1479] ss:$2 sm:$0xff] %v1453
    %s1481 = scalar_lea.vmem [#allocation1], 32
    %1482 = vst [vmem:[%s1481] ss:$2 sm:$0xff] %v1454
    %s1483 = scalar_lea.vmem [#allocation1], 33
    %1484 = vst [vmem:[%s1483] ss:$2 sm:$0xff] %v1455
    %s1485 = scalar_lea.vmem [#allocation1], 48
    %1486 = vst [vmem:[%s1485] ss:$2 sm:$0xff] %v1456
    %s1487 = scalar_lea.vmem [#allocation1], 49
    %1488 = vst [vmem:[%s1487] ss:$2 sm:$0xff] %v1457
    %v1489 = vld.sshfl [vmem:[#allocation1] sm:$0xff pattern:$0x75316420]
    %v1490 = vld.sshfl [vmem:[#allocation1 + $0x10] sm:$0xff pattern:$0x75316420]
    %v1491 = vld.sshfl [vmem:[#allocation1 + $0x20] sm:$0xff pattern:$0x75316420]
    %v1492 = vld.sshfl [vmem:[#allocation1 + $0x30] sm:$0xff pattern:$0x75316420]
    %v1493 = vsel %vm252, %v1489, 0
    %v1495 = vsel %vm252, %v1490, 0
    %v1497 = vsel %vm252, %v1491, 0
    %v1499 = vsel %vm252, %v1492, 0
    %1501 = vmatpush.msra.mxu0 0.0
    %1502 = vmatpush.msra.mxu0 0.0
    %1503 = vmatpush.msra.mxu0 0.0
    %1504 = vmatpush.msra.mxu0 0.0
    %1505 = vmatpush.msra.mxu0 0.0
    %1506 = vmatpush.msra.mxu0 0.0
    %1507 = vmatpush.msra.mxu0 0.0
    %1508 = vmatpush.msra.mxu0 0.0
    %1509 = vmatpush.msra.mxu0 0.0
    %1510 = vmatpush.msra.mxu0 0.0
    %1511 = vmatpush.msra.mxu0 0.0
    %1512 = vmatpush.msra.mxu0 0.0
    %1513 = vmatpush.msra.mxu0 %v1461
    %1514 = vmatpush.msra.mxu0 %v1460
    %1515 = vmatpush.msra.mxu0 %v1459
    %1516 = vmatpush.msra.mxu0 %v1458
    %1517 = vmatmul.f32.gmra.mxu0 %v1493
    %v1518 = vpop.f32.mrf.mxu0
    %v1519 = vadd.f32 %v1464, %v1518
    %1520 = vmatmul.f32.gmra.mxu0 %v1495
    %v1521 = vpop.f32.mrf.mxu0
    %v1522 = vadd.f32 %v1464, %v1521
    %1523 = vmatmul.f32.gmra.mxu0 %v1497
    %v1524 = vpop.f32.mrf.mxu0
    %v1525 = vadd.f32 %v1464, %v1524
    %1526 = vmatmul.f32.gmra.mxu0 %v1499
    %v1527 = vpop.f32.mrf.mxu0
    %v1528 = vadd.f32 %v1464, %v1527
    %1529 = vdwg.mxu0
    %v1530 = vmax.f32 %v1519, 0.0
    %v1531 = vmax.f32 %v1522, 0.0
    %v1532 = vmax.f32 %v1525, 0.0
    %v1533 = vmax.f32 %v1528, 0.0
    %v1534 = vld [vmem:[#allocation15] sm:$0xff]
    %v1535 = vld [vmem:[#allocation15 + $0x8] sm:$0xff]
    %v1536 = vld [vmem:[#allocation15 + $0x10] sm:$0xff]
    %v1537 = vld [vmem:[#allocation15 + $0x18] sm:$0xff]
    %v1538 = vld [vmem:[%s10] sm:$0x1]
    %v1540 = vperm.slane %v1538, 0
    %v1543 = vsel %vm252, %v1530, 0
    %v1546 = vsel %vm252, %v1531, 0
    %v1549 = vsel %vm252, %v1532, 0
    %v1552 = vsel %vm252, %v1533, 0
    %1554 = vmatpush.msra.mxu0 0.0
    %1555 = vmatpush.msra.mxu0 0.0
    %1556 = vmatpush.msra.mxu0 0.0
    %1557 = vmatpush.msra.mxu0 0.0
    %1558 = vmatpush.msra.mxu0 0.0
    %1559 = vmatpush.msra.mxu0 0.0
    %1560 = vmatpush.msra.mxu0 0.0
    %1561 = vmatpush.msra.mxu0 0.0
    %1562 = vmatpush.msra.mxu0 0.0
    %1563 = vmatpush.msra.mxu0 0.0
    %1564 = vmatpush.msra.mxu0 0.0
    %1565 = vmatpush.msra.mxu0 0.0
    %1566 = vmatpush.msra.mxu0 %v1537
    %1567 = vmatpush.msra.mxu0 %v1536
    %1568 = vmatpush.msra.mxu0 %v1535
    %1569 = vmatpush.msra.mxu0 %v1534
    %1570 = vmatmul.f32.gmra.mxu0 %v1543
    %v1571 = vpop.f32.mrf.mxu0
    %v1572 = vadd.f32 %v1540, %v1571
    %1573 = vmatmul.f32.gmra.mxu0 %v1546
    %v1574 = vpop.f32.mrf.mxu0
    %v1575 = vadd.f32 %v1540, %v1574
    %1576 = vmatmul.f32.gmra.mxu0 %v1549
    %v1577 = vpop.f32.mrf.mxu0
    %v1578 = vadd.f32 %v1540, %v1577
    %1579 = vmatmul.f32.gmra.mxu0 %v1552
    %v1580 = vpop.f32.mrf.mxu0
    %v1581 = vadd.f32 %v1540, %v1580
    %1582 = vdwg.mxu0
    %v1587 = vrot.slane %v1572, 4
    %v1588 = vrot.slane %v1575, 4
    %v1589 = vrot.slane %v1578, 4
    %v1590 = vrot.slane %v1581, 4
    %1595 = vst [vmem:[#allocation16] sm:$0xf] %v1572
    %1596 = vst [vmem:[#allocation16 + $0x4] sm:$0xf] %v1587
    %1597 = vst [vmem:[#allocation16 + $0x8] sm:$0xf] %v1575
    %1598 = vst [vmem:[#allocation16 + $0xc] sm:$0xf] %v1588
    %1599 = vst [vmem:[#allocation16 + $0x10] sm:$0xf] %v1578
    %1600 = vst [vmem:[#allocation16 + $0x14] sm:$0xf] %v1589
    %1601 = vst [vmem:[#allocation16 + $0x18] sm:$0xf] %v1581
    %1602 = vst [vmem:[#allocation16 + $0x1c] sm:$0xf] %v1590
    // Predicated region
    $region74: #{tpu_custom_call.1} parent=1 // pred_check
      _
    $region75: #{tpu_custom_call.1} parent=1 // pred_check_branch
      %1604 = sbr.rel (0) target = $region77
    $region76: #{tpu_custom_call.1} parent=1 // pred_region
      %1606 = vsyncadd [#allocation6], 0
      %s1607 = sshll.u32 [#allocation16], 4
      %s1608 = int_to_ptr.vmem [resolvable:$true] %s1607
      %s1609 = sshll.u32 %s11, 4
      %s1610 = int_to_ptr.hbm [resolvable:$true] %s1609
      %1615 = dma.vmem_to_hbm [thread:$0]  %s1608, 512, %s1610, [#allocation6], 64, 64, 4
    $region77: #{tpu_custom_call.1} parent=1 // pred_fallthru
      _
    // Predicated region
    $region78: #{tpu_custom_call.1} parent=1 // pred_check
      _
    $region79: #{tpu_custom_call.1} parent=1 // pred_check_branch
      %1617 = sbr.rel (0) target = $region81
    $region80: #{tpu_custom_call.1} parent=1 // pred_region
      %1619 = dma.done [#allocation6], 512
    $region81: #{tpu_custom_call.1} parent=1 // pred_fallthru
      _
    %1620 = vsyncpa [#allocation5], 1
    %1621 = vsyncpa [#allocation8], 1
    %1622 = vsyncpa [#allocation11], 1
    %1623 = vsyncpa [#allocation14], 1
    %1624 = vsyncpa [#allocation6], 1

</llo_original>
